<compile_context>
chip_gen: v7x
topology: tpu7x:2x2x1
jax: 0.10.0
libtpu: 0.0.40
codegen_flags: <defaults>
</compile_context>

<pallas_src>
import jax
import jax.numpy as jnp
from jax import lax
from jax.experimental import pallas as pl
from jax.experimental.pallas import tpu as pltpu


def _round_up(n, m):
    return ((n + m - 1) // m) * m


def _num_tensorcores():
    """Best-effort TensorCores-per-device; defaults to 1 (v5e/v6e are single-TC)."""
    try:
        info = pltpu.get_tpu_info()
        for attr in ("num_cores", "core_count", "num_tensorcores",
                     "tensorcores_per_chip", "cores_per_chip"):
            v = getattr(info, attr, None)
            if isinstance(v, int) and v >= 1:
                return v
    except Exception:
        pass
    return 1


def _sigmoid(x):
    # One EUP op (tanh) + cheap VPU ops instead of exp+reciprocal (2 EUP ops).
    # The per-timestep dependent chain is EUP-bound at tiny M, so this shortens it.
    return 0.5 * jnp.tanh(0.5 * x) + 0.5


def _lstm_recurrent_kernel(gx_ref, whh_hbm, h_out_ref, whh_vmem, h_sc, c_sc):
    """One grid step == TB timesteps of the LSTM recurrence for one batch shard.

    gx_ref   : (TB, Bblk, 4Hp) VMEM   precomputed input gates (x@Wih^T + bias), time-major
    whh_hbm  : (Hp, 4Hp)       HBM    Whh^T (memory_space=pl.ANY; copied once per shard)
    h_out_ref: (TB, Bblk, Hp)  VMEM   hidden state per timestep (lane-dense output)
    whh_vmem : (Hp, 4Hp)       VMEM scratch — single-buffered resident copy of Whh^T
    h_sc,c_sc: (Bblk, Hp)      f32 VMEM scratch — recurrent state carried over time
    """
    s = pl.program_id(1)          # time-chunk index (sequential / "arbitrary")

    @pl.when(s == 0)
    def _init():
        # Constant-across-grid Whh^T: one DMA per batch shard into a SINGLE VMEM buffer
        # (vs. 2x double-buffered BlockSpec input).
        pltpu.sync_copy(whh_hbm, whh_vmem)
        h_sc[...] = jnp.zeros_like(h_sc)
        c_sc[...] = jnp.zeros_like(c_sc)

    Hp = h_sc.shape[1]
    TB = gx_ref.shape[0]
    mm_dtype = whh_vmem.dtype      # bf16 by default (f32 accumulation below)

    def step(t, carry):
        # Only the H-contraction stays in the serial loop; D-contraction + bias hoisted.
        # NOTE: gx is f32 today; the astype guards a future bf16 gates_x opt-in.
        gates = (gx_ref[t].astype(jnp.float32)
                 + jnp.dot(h_sc[...].astype(mm_dtype), whh_vmem[...],
                           preferred_element_type=jnp.float32))      # (Bblk, 4Hp) f32

        # PyTorch gate order: i, f, g, o.  Hp is a multiple of 128 -> aligned slices.
        i = _sigmoid(gates[:, 0:Hp])
        f = _sigmoid(gates[:, Hp:2 * Hp])
        g = jnp.tanh(gates[:, 2 * Hp:3 * Hp])
        o = _sigmoid(gates[:, 3 * Hp:4 * Hp])

        c_new = f * c_sc[...] + i * g
        h_new = o * jnp.tanh(c_new)

        c_sc[...] = c_new
        h_sc[...] = h_new
        h_out_ref[t] = h_new.astype(h_out_ref.dtype)
        return carry

    # Full unroll for small Hp; cap at 8 for wide hidden states so live vregs / the
    # single vector-store slot (v5e) don't become the bottleneck.
    unroll = TB if Hp <= 128 else min(TB, 8)
    lax.fori_loop(0, TB, step, 0, unroll=unroll)


def bilstm_forward(x, params, *, time_block=32, matmul_dtype=jnp.bfloat16):
    """x: (B, T, D) float32.  Returns (B, T, O) float32 (matches PyTorch forward).

    matmul_dtype: dtype of Whh^T / the h operand for the in-kernel MXU matmul.
      bf16 (default) is the fast path on every TPU generation (f32 accumulation and
      f32 h/c state are kept); pass jnp.float32 for the exact-precision path.
    """
    B, T, D = x.shape
    w_ih = params["w_ih"]          # (4H, D)
    w_hh = params["w_hh"]          # (4H, H)
    b_ih = params["b_ih"]          # (4H,)
    b_hh = params["b_hh"]          # (4H,)
    w_fc = params["w_fc"]          # (O, H)
    b_fc = params["b_fc"]          # (O,)
    H = w_hh.shape[1]

    # ---- alignment / padding / sharding choices --------------------------------------
    Hp = _round_up(H, 128)                       # lane-aligned hidden width
    Bp = _round_up(B, 8)                         # sublane-aligned batch
    n_tc = _num_tensorcores()
    if n_tc >= 2 and Bp >= 16:                   # split batch only if a 2nd TC exists (v7x)
        Bp = _round_up(B, 16)
        n_b = 2
    else:                                        # single-TC (v5e/v6e): one shard, full MXU M
        n_b = 1
    b_blk = Bp // n_b
    TB = max(1, min(time_block, T))              # timesteps per grid step
    Tp = _round_up(T, TB)
    n_t = Tp // TB

    hi = lax.Precision.HIGHEST                   # exact f32 for the hoisted XLA matmuls

    # ---- pad weights per-gate so padded hidden lanes stay exactly zero ---------------
    w_ih_p = jnp.pad(w_ih.reshape(4, H, D),
                     ((0, 0), (0, Hp - H), (0, 0))).reshape(4 * Hp, D)
    bias_p = jnp.pad((b_ih + b_hh).reshape(4, H),
                     ((0, 0), (0, Hp - H))).reshape(4 * Hp)
    w_hh_p = jnp.pad(w_hh.reshape(4, H, H),
                     ((0, 0), (0, Hp - H), (0, Hp - H))).reshape(4 * Hp, Hp)
    whh_t = jnp.transpose(w_hh_p).astype(matmul_dtype)       # (Hp, 4Hp)
    w_fc_p = jnp.pad(w_fc, ((0, 0), (0, Hp - H)))             # (O, Hp) — padded h lanes are 0

    # ---- hoisted input projection: one big matmul, emitted directly into the padded,
    # ---- time-major slab (pad x, not the large gates_x intermediate) -----------------
    x_p = jnp.pad(x, ((0, Bp - B), (0, Tp - T), (0, 0)))
    gates_x = jnp.einsum("btd,gd->tbg", x_p, w_ih_p, precision=hi) + bias_p   # (Tp,Bp,4Hp) f32

    # ---- explicit VMEM budget ----------------------------------------------------------
    gx_blk_bytes = TB * b_blk * 4 * Hp * gates_x.dtype.itemsize
    out_blk_bytes = TB * b_blk * Hp * 4
    whh_bytes = Hp * 4 * Hp * jnp.dtype(matmul_dtype).itemsize
    hc_bytes = 2 * b_blk * Hp * 4
    vmem_needed = 2 * gx_blk_bytes + 2 * out_blk_bytes + whh_bytes + hc_bytes
    vmem_limit = int(min(max(2 * vmem_needed + (4 << 20), 16 << 20), 100 << 20))

    # ---- recurrent Pallas kernel ------------------------------------------------------
    grid_spec = pltpu.PrefetchScalarGridSpec(
        num_scalar_prefetch=0,
        grid=(n_b, n_t),
        in_specs=[
            pl.BlockSpec((TB, b_blk, 4 * Hp), lambda b, s: (s, b, 0)),
            pl.BlockSpec(memory_space=pl.ANY),        # Whh^T stays in HBM; copied once
        ],
        out_specs=pl.BlockSpec((TB, b_blk, Hp), lambda b, s: (s, b, 0)),
        scratch_shapes=[
            pltpu.VMEM((Hp, 4 * Hp), matmul_dtype),   # resident Whh^T (single buffer)
            pltpu.VMEM((b_blk, Hp), jnp.float32),     # h
            pltpu.VMEM((b_blk, Hp), jnp.float32),     # c
        ],
    )

    h_all = pl.pallas_call(
        _lstm_recurrent_kernel,
        out_shape=jax.ShapeDtypeStruct((Tp, Bp, Hp), jnp.float32),
        grid_spec=grid_spec,
        compiler_params=pltpu.CompilerParams(
            # batch shards independent -> parallel (megacore); time carries state -> arbitrary
            dimension_semantics=("parallel", "arbitrary"),
            vmem_limit_bytes=vmem_limit),
    )(gates_x, whh_t)

    # ---- hoisted FC head: one big matmul folding the (T,B,H)->(B,T,O) reorder.
    # w_fc is padded to Hp, so no lane-misaligned ':H' slice of the kernel output.
    y = jnp.einsum("tbh,oh->bto", h_all[:T, :B, :], w_fc_p, precision=hi) + b_fc
    return y


def bilstm_reference(x, params):
    """Pure-JAX reference of the PyTorch forward (eval semantics; dropout is a no-op
    for num_layers=1)."""
    w_ih, w_hh = params["w_ih"], params["w_hh"]
    b_ih, b_hh = params["b_ih"], params["b_hh"]
    w_fc, b_fc = params["w_fc"], params["b_fc"]
    B, T, D = x.shape
    H = w_hh.shape[1]
    hi = lax.Precision.HIGHEST

    def step(carry, x_t):
        h, c = carry
        gates = (jnp.dot(x_t, w_ih.T, precision=hi) + b_ih
                 + jnp.dot(h, w_hh.T, precision=hi) + b_hh)
        i = jax.nn.sigmoid(gates[:, 0:H])
        f = jax.nn.sigmoid(gates[:, H:2 * H])
        g = jnp.tanh(gates[:, 2 * H:3 * H])
        o = jax.nn.sigmoid(gates[:, 3 * H:4 * H])
        c = f * c + i * g
        h = o * jnp.tanh(c)
        return (h, c), h

    h0 = jnp.zeros((B, H), jnp.float32)
    c0 = jnp.zeros((B, H), jnp.float32)
    _, hs = lax.scan(step, (h0, c0), jnp.transpose(x, (1, 0, 2)))
    hs = jnp.transpose(hs, (1, 0, 2))                       # (B, T, H)
    return jnp.dot(hs, w_fc.T, precision=hi) + b_fc


def init_params(key, input_dim, hidden_dim, output_dim):
    ks = jax.random.split(key, 6)
    k = 1.0 / jnp.sqrt(hidden_dim)
    u = lambda kk, shape: jax.random.uniform(kk, shape, jnp.float32, -k, k)
    return {
        "w_ih": u(ks[0], (4 * hidden_dim, input_dim)),
        "w_hh": u(ks[1], (4 * hidden_dim, hidden_dim)),
        "b_ih": u(ks[2], (4 * hidden_dim,)),
        "b_hh": u(ks[3], (4 * hidden_dim,)),
        "w_fc": u(ks[4], (output_dim, hidden_dim)),
        "b_fc": u(ks[5], (output_dim,)),
    }


if __name__ == "__main__":
    # Note: despite the class name "BiLSTM", the PyTorch module is a unidirectional
    # single-layer LSTM (bidirectional is not set), which is what is implemented here.
    B, T, D, H, O = 2, 8, 16, 32, 8
    key = jax.random.PRNGKey(0)
    kx, kp = jax.random.split(key)
    x = jax.random.normal(kx, (B, T, D), jnp.float32)
    params = init_params(kp, D, H, O)

    y_ref = bilstm_reference(x, params)

    # Exact-precision path (f32 Whh on the MXU): tight check against the f32 reference.
    y_f32 = jax.block_until_ready(bilstm_forward(x, params, matmul_dtype=jnp.float32))
    assert y_f32.shape == (B, T, O), y_f32.shape
    err_f32 = float(jnp.max(jnp.abs(y_f32 - y_ref)))
    assert err_f32 < 5e-5, err_f32

    # Fast path (bf16 Whh / h operand on the MXU, f32 accumulation and f32 h/c state):
    # tolerance relaxed per bf16 rounding of the recurrent matmul.
    y_fast = jax.block_until_ready(bilstm_forward(x, params))
    assert y_fast.shape == (B, T, O), y_fast.shape
    err_fast = float(jnp.max(jnp.abs(y_fast - y_ref)))
    assert err_fast < 2e-2, err_fast

    print("KERNEL_OK")
</pallas_src>

<mosaic_0001>
module attributes {stable_mosaic.version = 11 : i64} {
  func.func @_lstm_recurrent_kernel(%arg0: i32, %arg1: i32, %arg2: memref<8x8x512xf32, #tpu.memory_space<vmem>>, %arg3: memref<128x512xf32, #tpu.memory_space<any>>, %arg4: memref<8x8x128xf32, #tpu.memory_space<vmem>>, %arg5: memref<128x512xf32, #tpu.memory_space<vmem>>, %arg6: memref<8x128xf32, #tpu.memory_space<vmem>>, %arg7: memref<8x128xf32, #tpu.memory_space<vmem>>) attributes {dimension_semantics = [#tpu.dimension_semantics<parallel>, #tpu.dimension_semantics<arbitrary>], iteration_bounds = array<i64: 1, 1>, scalar_prefetch = 0 : i64, scratch_operands = 3 : i64, tpu.core_type = #tpu.core_type<tc>, window_params = [{transform_indices = @transform_0, window_bounds = array<i64: 8, 8, 512>}, {}, {transform_indices = @transform_2, window_bounds = array<i64: 8, 8, 128>}]} {
    %c0_i32 = arith.constant 0 : i32
    %0 = arith.cmpi eq, %arg1, %c0_i32 : i32
    %1 = arith.extui %0 : i1 to i32
    %c0_i32_0 = arith.constant 0 : i32
    %2 = arith.cmpi ne, %1, %c0_i32_0 : i32
    scf.if %2 {
      "tpu.region"() ({
        %367 = tpu.sem_alloc : memref<!tpu.dma_semaphore, #tpu.memory_space<semaphore_mem>>
        tpu.enqueue_dma source(%arg3 : memref<128x512xf32, #tpu.memory_space<any>>) target(%arg5 : memref<128x512xf32, #tpu.memory_space<vmem>>) target_semaphore(%367 : memref<!tpu.dma_semaphore, #tpu.memory_space<semaphore_mem>>)
        tpu.wait_dma2 semaphore(%367 : memref<!tpu.dma_semaphore, #tpu.memory_space<semaphore_mem>>) src(%arg3 : memref<128x512xf32, #tpu.memory_space<any>>) dst(%arg5 : memref<128x512xf32, #tpu.memory_space<vmem>>)
        tpu.yield
      }) : () -> ()
      %cst_192 = arith.constant 0.000000e+00 : f32
      %363 = vector.broadcast %cst_192 : f32 to vector<8x128xf32>
      %c0_193 = arith.constant 0 : index
      %c0_194 = arith.constant 0 : index
      %364 = vector.load %arg6[%c0_193, %c0_194] : memref<8x128xf32, #tpu.memory_space<vmem>>, vector<8x128xf32>
      tpu.vector_store %arg6[%c0_193, %c0_194], %363 {strides = array<i32>} : memref<8x128xf32, #tpu.memory_space<vmem>>, vector<8x128xf32>,
      %cst_195 = arith.constant 0.000000e+00 : f32
      %365 = vector.broadcast %cst_195 : f32 to vector<8x128xf32>
      %c0_196 = arith.constant 0 : index
      %c0_197 = arith.constant 0 : index
      %366 = vector.load %arg7[%c0_196, %c0_197] : memref<8x128xf32, #tpu.memory_space<vmem>>, vector<8x128xf32>
      tpu.vector_store %arg7[%c0_196, %c0_197], %365 {strides = array<i32>} : memref<8x128xf32, #tpu.memory_space<vmem>>, vector<8x128xf32>,
    } else {
    }
    %c0_i32_1 = arith.constant 0 : i32
    %3 = arith.index_cast %c0_i32_1 : i32 to index
    %c0 = arith.constant 0 : index
    %c0_2 = arith.constant 0 : index
    %4 = vector.load %arg2[%3, %c0, %c0_2] : memref<8x8x512xf32, #tpu.memory_space<vmem>>, vector<1x8x512xf32>
    %5 = vector.shape_cast %4 : vector<1x8x512xf32> to vector<8x512xf32>
    %c0_3 = arith.constant 0 : index
    %c0_4 = arith.constant 0 : index
    %6 = vector.load %arg6[%c0_3, %c0_4] : memref<8x128xf32, #tpu.memory_space<vmem>>, vector<8x128xf32>
    %c0_5 = arith.constant 0 : index
    %c0_6 = arith.constant 0 : index
    %7 = vector.load %arg5[%c0_5, %c0_6] : memref<128x512xf32, #tpu.memory_space<vmem>>, vector<128x512xf32>
    %cst = arith.constant dense<0.000000e+00> : vector<8x512xf32>
    %8 = tpu.matmul %6, %7, %cst {dimension_numbers = #tpu.dot_dimension_numbers<[1], [0], [0], [1], [0, 0, 1, 1], [], []>} : vector<8x128xf32>, vector<128x512xf32>, vector<8x512xf32> -> vector<8x512xf32>
    %9 = arith.addf %5, %8 : vector<8x512xf32>
    %10 = vector.extract_strided_slice %9 {offsets = [0, 0], sizes = [8, 128], strides = [1, 1]} : vector<8x512xf32> to vector<8x128xf32>
    %cst_7 = arith.constant 5.000000e-01 : f32
    %11 = vector.broadcast %cst_7 : f32 to vector<8x128xf32>
    %12 = arith.mulf %11, %10 : vector<8x128xf32>
    %13 = math.tanh %12 : vector<8x128xf32>
    %cst_8 = arith.constant 5.000000e-01 : f32
    %14 = vector.broadcast %cst_8 : f32 to vector<8x128xf32>
    %15 = arith.mulf %14, %13 : vector<8x128xf32>
    %cst_9 = arith.constant 5.000000e-01 : f32
    %16 = vector.broadcast %cst_9 : f32 to vector<8x128xf32>
    %17 = arith.addf %15, %16 : vector<8x128xf32>
    %18 = vector.extract_strided_slice %9 {offsets = [0, 128], sizes = [8, 128], strides = [1, 1]} : vector<8x512xf32> to vector<8x128xf32>
    %cst_10 = arith.constant 5.000000e-01 : f32
    %19 = vector.broadcast %cst_10 : f32 to vector<8x128xf32>
    %20 = arith.mulf %19, %18 : vector<8x128xf32>
    %21 = math.tanh %20 : vector<8x128xf32>
    %cst_11 = arith.constant 5.000000e-01 : f32
    %22 = vector.broadcast %cst_11 : f32 to vector<8x128xf32>
    %23 = arith.mulf %22, %21 : vector<8x128xf32>
    %cst_12 = arith.constant 5.000000e-01 : f32
    %24 = vector.broadcast %cst_12 : f32 to vector<8x128xf32>
    %25 = arith.addf %23, %24 : vector<8x128xf32>
    %26 = vector.extract_strided_slice %9 {offsets = [0, 256], sizes = [8, 128], strides = [1, 1]} : vector<8x512xf32> to vector<8x128xf32>
    %27 = math.tanh %26 : vector<8x128xf32>
    %28 = vector.extract_strided_slice %9 {offsets = [0, 384], sizes = [8, 128], strides = [1, 1]} : vector<8x512xf32> to vector<8x128xf32>
    %cst_13 = arith.constant 5.000000e-01 : f32
    %29 = vector.broadcast %cst_13 : f32 to vector<8x128xf32>
    %30 = arith.mulf %29, %28 : vector<8x128xf32>
    %31 = math.tanh %30 : vector<8x128xf32>
    %cst_14 = arith.constant 5.000000e-01 : f32
    %32 = vector.broadcast %cst_14 : f32 to vector<8x128xf32>
    %33 = arith.mulf %32, %31 : vector<8x128xf32>
    %cst_15 = arith.constant 5.000000e-01 : f32
    %34 = vector.broadcast %cst_15 : f32 to vector<8x128xf32>
    %35 = arith.addf %33, %34 : vector<8x128xf32>
    %c0_16 = arith.constant 0 : index
    %c0_17 = arith.constant 0 : index
    %36 = vector.load %arg7[%c0_16, %c0_17] : memref<8x128xf32, #tpu.memory_space<vmem>>, vector<8x128xf32>
    %37 = arith.mulf %25, %36 : vector<8x128xf32>
    %38 = arith.mulf %17, %27 : vector<8x128xf32>
    %39 = arith.addf %37, %38 : vector<8x128xf32>
    %40 = math.tanh %39 : vector<8x128xf32>
    %41 = arith.mulf %35, %40 : vector<8x128xf32>
    %c0_18 = arith.constant 0 : index
    %c0_19 = arith.constant 0 : index
    %42 = vector.load %arg7[%c0_18, %c0_19] : memref<8x128xf32, #tpu.memory_space<vmem>>, vector<8x128xf32>
    tpu.vector_store %arg7[%c0_18, %c0_19], %39 {strides = array<i32>} : memref<8x128xf32, #tpu.memory_space<vmem>>, vector<8x128xf32>,
    %c0_20 = arith.constant 0 : index
    %c0_21 = arith.constant 0 : index
    %43 = vector.load %arg6[%c0_20, %c0_21] : memref<8x128xf32, #tpu.memory_space<vmem>>, vector<8x128xf32>
    tpu.vector_store %arg6[%c0_20, %c0_21], %41 {strides = array<i32>} : memref<8x128xf32, #tpu.memory_space<vmem>>, vector<8x128xf32>,
    %44 = arith.index_cast %c0_i32_1 : i32 to index
    %c0_22 = arith.constant 0 : index
    %c0_23 = arith.constant 0 : index
    %45 = vector.load %arg4[%44, %c0_22, %c0_23] : memref<8x8x128xf32, #tpu.memory_space<vmem>>, vector<1x8x128xf32>
    %46 = vector.shape_cast %45 : vector<1x8x128xf32> to vector<8x128xf32>
    %47 = vector.shape_cast %41 : vector<8x128xf32> to vector<1x8x128xf32>
    tpu.vector_store %arg4[%44, %c0_22, %c0_23], %47 {strides = array<i32>} : memref<8x8x128xf32, #tpu.memory_space<vmem>>, vector<1x8x128xf32>,
    %c1_i32 = arith.constant 1 : i32
    %48 = arith.index_cast %c1_i32 : i32 to index
    %c0_24 = arith.constant 0 : index
    %c0_25 = arith.constant 0 : index
    %49 = vector.load %arg2[%48, %c0_24, %c0_25] : memref<8x8x512xf32, #tpu.memory_space<vmem>>, vector<1x8x512xf32>
    %50 = vector.shape_cast %49 : vector<1x8x512xf32> to vector<8x512xf32>
    %c0_26 = arith.constant 0 : index
    %c0_27 = arith.constant 0 : index
    %51 = vector.load %arg6[%c0_26, %c0_27] : memref<8x128xf32, #tpu.memory_space<vmem>>, vector<8x128xf32>
    %c0_28 = arith.constant 0 : index
    %c0_29 = arith.constant 0 : index
    %52 = vector.load %arg5[%c0_28, %c0_29] : memref<128x512xf32, #tpu.memory_space<vmem>>, vector<128x512xf32>
    %cst_30 = arith.constant dense<0.000000e+00> : vector<8x512xf32>
    %53 = tpu.matmul %51, %52, %cst_30 {dimension_numbers = #tpu.dot_dimension_numbers<[1], [0], [0], [1], [0, 0, 1, 1], [], []>} : vector<8x128xf32>, vector<128x512xf32>, vector<8x512xf32> -> vector<8x512xf32>
    %54 = arith.addf %50, %53 : vector<8x512xf32>
    %55 = vector.extract_strided_slice %54 {offsets = [0, 0], sizes = [8, 128], strides = [1, 1]} : vector<8x512xf32> to vector<8x128xf32>
    %cst_31 = arith.constant 5.000000e-01 : f32
    %56 = vector.broadcast %cst_31 : f32 to vector<8x128xf32>
    %57 = arith.mulf %56, %55 : vector<8x128xf32>
    %58 = math.tanh %57 : vector<8x128xf32>
    %cst_32 = arith.constant 5.000000e-01 : f32
    %59 = vector.broadcast %cst_32 : f32 to vector<8x128xf32>
    %60 = arith.mulf %59, %58 : vector<8x128xf32>
    %cst_33 = arith.constant 5.000000e-01 : f32
    %61 = vector.broadcast %cst_33 : f32 to vector<8x128xf32>
    %62 = arith.addf %60, %61 : vector<8x128xf32>
    %63 = vector.extract_strided_slice %54 {offsets = [0, 128], sizes = [8, 128], strides = [1, 1]} : vector<8x512xf32> to vector<8x128xf32>
    %cst_34 = arith.constant 5.000000e-01 : f32
    %64 = vector.broadcast %cst_34 : f32 to vector<8x128xf32>
    %65 = arith.mulf %64, %63 : vector<8x128xf32>
    %66 = math.tanh %65 : vector<8x128xf32>
    %cst_35 = arith.constant 5.000000e-01 : f32
    %67 = vector.broadcast %cst_35 : f32 to vector<8x128xf32>
    %68 = arith.mulf %67, %66 : vector<8x128xf32>
    %cst_36 = arith.constant 5.000000e-01 : f32
    %69 = vector.broadcast %cst_36 : f32 to vector<8x128xf32>
    %70 = arith.addf %68, %69 : vector<8x128xf32>
    %71 = vector.extract_strided_slice %54 {offsets = [0, 256], sizes = [8, 128], strides = [1, 1]} : vector<8x512xf32> to vector<8x128xf32>
    %72 = math.tanh %71 : vector<8x128xf32>
    %73 = vector.extract_strided_slice %54 {offsets = [0, 384], sizes = [8, 128], strides = [1, 1]} : vector<8x512xf32> to vector<8x128xf32>
    %cst_37 = arith.constant 5.000000e-01 : f32
    %74 = vector.broadcast %cst_37 : f32 to vector<8x128xf32>
    %75 = arith.mulf %74, %73 : vector<8x128xf32>
    %76 = math.tanh %75 : vector<8x128xf32>
    %cst_38 = arith.constant 5.000000e-01 : f32
    %77 = vector.broadcast %cst_38 : f32 to vector<8x128xf32>
    %78 = arith.mulf %77, %76 : vector<8x128xf32>
    %cst_39 = arith.constant 5.000000e-01 : f32
    %79 = vector.broadcast %cst_39 : f32 to vector<8x128xf32>
    %80 = arith.addf %78, %79 : vector<8x128xf32>
    %c0_40 = arith.constant 0 : index
    %c0_41 = arith.constant 0 : index
    %81 = vector.load %arg7[%c0_40, %c0_41] : memref<8x128xf32, #tpu.memory_space<vmem>>, vector<8x128xf32>
    %82 = arith.mulf %70, %81 : vector<8x128xf32>
    %83 = arith.mulf %62, %72 : vector<8x128xf32>
    %84 = arith.addf %82, %83 : vector<8x128xf32>
    %85 = math.tanh %84 : vector<8x128xf32>
    %86 = arith.mulf %80, %85 : vector<8x128xf32>
    %c0_42 = arith.constant 0 : index
    %c0_43 = arith.constant 0 : index
    %87 = vector.load %arg7[%c0_42, %c0_43] : memref<8x128xf32, #tpu.memory_space<vmem>>, vector<8x128xf32>
    tpu.vector_store %arg7[%c0_42, %c0_43], %84 {strides = array<i32>} : memref<8x128xf32, #tpu.memory_space<vmem>>, vector<8x128xf32>,
    %c0_44 = arith.constant 0 : index
    %c0_45 = arith.constant 0 : index
    %88 = vector.load %arg6[%c0_44, %c0_45] : memref<8x128xf32, #tpu.memory_space<vmem>>, vector<8x128xf32>
    tpu.vector_store %arg6[%c0_44, %c0_45], %86 {strides = array<i32>} : memref<8x128xf32, #tpu.memory_space<vmem>>, vector<8x128xf32>,
    %89 = arith.index_cast %c1_i32 : i32 to index
    %c0_46 = arith.constant 0 : index
    %c0_47 = arith.constant 0 : index
    %90 = vector.load %arg4[%89, %c0_46, %c0_47] : memref<8x8x128xf32, #tpu.memory_space<vmem>>, vector<1x8x128xf32>
    %91 = vector.shape_cast %90 : vector<1x8x128xf32> to vector<8x128xf32>
    %92 = vector.shape_cast %86 : vector<8x128xf32> to vector<1x8x128xf32>
    tpu.vector_store %arg4[%89, %c0_46, %c0_47], %92 {strides = array<i32>} : memref<8x8x128xf32, #tpu.memory_space<vmem>>, vector<1x8x128xf32>,
    %c2_i32 = arith.constant 2 : i32
    %93 = arith.index_cast %c2_i32 : i32 to index
    %c0_48 = arith.constant 0 : index
    %c0_49 = arith.constant 0 : index
    %94 = vector.load %arg2[%93, %c0_48, %c0_49] : memref<8x8x512xf32, #tpu.memory_space<vmem>>, vector<1x8x512xf32>
    %95 = vector.shape_cast %94 : vector<1x8x512xf32> to vector<8x512xf32>
    %c0_50 = arith.constant 0 : index
    %c0_51 = arith.constant 0 : index
    %96 = vector.load %arg6[%c0_50, %c0_51] : memref<8x128xf32, #tpu.memory_space<vmem>>, vector<8x128xf32>
    %c0_52 = arith.constant 0 : index
    %c0_53 = arith.constant 0 : index
    %97 = vector.load %arg5[%c0_52, %c0_53] : memref<128x512xf32, #tpu.memory_space<vmem>>, vector<128x512xf32>
    %cst_54 = arith.constant dense<0.000000e+00> : vector<8x512xf32>
    %98 = tpu.matmul %96, %97, %cst_54 {dimension_numbers = #tpu.dot_dimension_numbers<[1], [0], [0], [1], [0, 0, 1, 1], [], []>} : vector<8x128xf32>, vector<128x512xf32>, vector<8x512xf32> -> vector<8x512xf32>
    %99 = arith.addf %95, %98 : vector<8x512xf32>
    %100 = vector.extract_strided_slice %99 {offsets = [0, 0], sizes = [8, 128], strides = [1, 1]} : vector<8x512xf32> to vector<8x128xf32>
    %cst_55 = arith.constant 5.000000e-01 : f32
    %101 = vector.broadcast %cst_55 : f32 to vector<8x128xf32>
    %102 = arith.mulf %101, %100 : vector<8x128xf32>
    %103 = math.tanh %102 : vector<8x128xf32>
    %cst_56 = arith.constant 5.000000e-01 : f32
    %104 = vector.broadcast %cst_56 : f32 to vector<8x128xf32>
    %105 = arith.mulf %104, %103 : vector<8x128xf32>
    %cst_57 = arith.constant 5.000000e-01 : f32
    %106 = vector.broadcast %cst_57 : f32 to vector<8x128xf32>
    %107 = arith.addf %105, %106 : vector<8x128xf32>
    %108 = vector.extract_strided_slice %99 {offsets = [0, 128], sizes = [8, 128], strides = [1, 1]} : vector<8x512xf32> to vector<8x128xf32>
    %cst_58 = arith.constant 5.000000e-01 : f32
    %109 = vector.broadcast %cst_58 : f32 to vector<8x128xf32>
    %110 = arith.mulf %109, %108 : vector<8x128xf32>
    %111 = math.tanh %110 : vector<8x128xf32>
    %cst_59 = arith.constant 5.000000e-01 : f32
    %112 = vector.broadcast %cst_59 : f32 to vector<8x128xf32>
    %113 = arith.mulf %112, %111 : vector<8x128xf32>
    %cst_60 = arith.constant 5.000000e-01 : f32
    %114 = vector.broadcast %cst_60 : f32 to vector<8x128xf32>
    %115 = arith.addf %113, %114 : vector<8x128xf32>
    %116 = vector.extract_strided_slice %99 {offsets = [0, 256], sizes = [8, 128], strides = [1, 1]} : vector<8x512xf32> to vector<8x128xf32>
    %117 = math.tanh %116 : vector<8x128xf32>
    %118 = vector.extract_strided_slice %99 {offsets = [0, 384], sizes = [8, 128], strides = [1, 1]} : vector<8x512xf32> to vector<8x128xf32>
    %cst_61 = arith.constant 5.000000e-01 : f32
    %119 = vector.broadcast %cst_61 : f32 to vector<8x128xf32>
    %120 = arith.mulf %119, %118 : vector<8x128xf32>
    %121 = math.tanh %120 : vector<8x128xf32>
    %cst_62 = arith.constant 5.000000e-01 : f32
    %122 = vector.broadcast %cst_62 : f32 to vector<8x128xf32>
    %123 = arith.mulf %122, %121 : vector<8x128xf32>
    %cst_63 = arith.constant 5.000000e-01 : f32
    %124 = vector.broadcast %cst_63 : f32 to vector<8x128xf32>
    %125 = arith.addf %123, %124 : vector<8x128xf32>
    %c0_64 = arith.constant 0 : index
    %c0_65 = arith.constant 0 : index
    %126 = vector.load %arg7[%c0_64, %c0_65] : memref<8x128xf32, #tpu.memory_space<vmem>>, vector<8x128xf32>
    %127 = arith.mulf %115, %126 : vector<8x128xf32>
    %128 = arith.mulf %107, %117 : vector<8x128xf32>
    %129 = arith.addf %127, %128 : vector<8x128xf32>
    %130 = math.tanh %129 : vector<8x128xf32>
    %131 = arith.mulf %125, %130 : vector<8x128xf32>
    %c0_66 = arith.constant 0 : index
    %c0_67 = arith.constant 0 : index
    %132 = vector.load %arg7[%c0_66, %c0_67] : memref<8x128xf32, #tpu.memory_space<vmem>>, vector<8x128xf32>
    tpu.vector_store %arg7[%c0_66, %c0_67], %129 {strides = array<i32>} : memref<8x128xf32, #tpu.memory_space<vmem>>, vector<8x128xf32>,
    %c0_68 = arith.constant 0 : index
    %c0_69 = arith.constant 0 : index
    %133 = vector.load %arg6[%c0_68, %c0_69] : memref<8x128xf32, #tpu.memory_space<vmem>>, vector<8x128xf32>
    tpu.vector_store %arg6[%c0_68, %c0_69], %131 {strides = array<i32>} : memref<8x128xf32, #tpu.memory_space<vmem>>, vector<8x128xf32>,
    %134 = arith.index_cast %c2_i32 : i32 to index
    %c0_70 = arith.constant 0 : index
    %c0_71 = arith.constant 0 : index
    %135 = vector.load %arg4[%134, %c0_70, %c0_71] : memref<8x8x128xf32, #tpu.memory_space<vmem>>, vector<1x8x128xf32>
    %136 = vector.shape_cast %135 : vector<1x8x128xf32> to vector<8x128xf32>
    %137 = vector.shape_cast %131 : vector<8x128xf32> to vector<1x8x128xf32>
    tpu.vector_store %arg4[%134, %c0_70, %c0_71], %137 {strides = array<i32>} : memref<8x8x128xf32, #tpu.memory_space<vmem>>, vector<1x8x128xf32>,
    %c3_i32 = arith.constant 3 : i32
    %138 = arith.index_cast %c3_i32 : i32 to index
    %c0_72 = arith.constant 0 : index
    %c0_73 = arith.constant 0 : index
    %139 = vector.load %arg2[%138, %c0_72, %c0_73] : memref<8x8x512xf32, #tpu.memory_space<vmem>>, vector<1x8x512xf32>
    %140 = vector.shape_cast %139 : vector<1x8x512xf32> to vector<8x512xf32>
    %c0_74 = arith.constant 0 : index
    %c0_75 = arith.constant 0 : index
    %141 = vector.load %arg6[%c0_74, %c0_75] : memref<8x128xf32, #tpu.memory_space<vmem>>, vector<8x128xf32>
    %c0_76 = arith.constant 0 : index
    %c0_77 = arith.constant 0 : index
    %142 = vector.load %arg5[%c0_76, %c0_77] : memref<128x512xf32, #tpu.memory_space<vmem>>, vector<128x512xf32>
    %cst_78 = arith.constant dense<0.000000e+00> : vector<8x512xf32>
    %143 = tpu.matmul %141, %142, %cst_78 {dimension_numbers = #tpu.dot_dimension_numbers<[1], [0], [0], [1], [0, 0, 1, 1], [], []>} : vector<8x128xf32>, vector<128x512xf32>, vector<8x512xf32> -> vector<8x512xf32>
    %144 = arith.addf %140, %143 : vector<8x512xf32>
    %145 = vector.extract_strided_slice %144 {offsets = [0, 0], sizes = [8, 128], strides = [1, 1]} : vector<8x512xf32> to vector<8x128xf32>
    %cst_79 = arith.constant 5.000000e-01 : f32
    %146 = vector.broadcast %cst_79 : f32 to vector<8x128xf32>
    %147 = arith.mulf %146, %145 : vector<8x128xf32>
    %148 = math.tanh %147 : vector<8x128xf32>
    %cst_80 = arith.constant 5.000000e-01 : f32
    %149 = vector.broadcast %cst_80 : f32 to vector<8x128xf32>
    %150 = arith.mulf %149, %148 : vector<8x128xf32>
    %cst_81 = arith.constant 5.000000e-01 : f32
    %151 = vector.broadcast %cst_81 : f32 to vector<8x128xf32>
    %152 = arith.addf %150, %151 : vector<8x128xf32>
    %153 = vector.extract_strided_slice %144 {offsets = [0, 128], sizes = [8, 128], strides = [1, 1]} : vector<8x512xf32> to vector<8x128xf32>
    %cst_82 = arith.constant 5.000000e-01 : f32
    %154 = vector.broadcast %cst_82 : f32 to vector<8x128xf32>
    %155 = arith.mulf %154, %153 : vector<8x128xf32>
    %156 = math.tanh %155 : vector<8x128xf32>
    %cst_83 = arith.constant 5.000000e-01 : f32
    %157 = vector.broadcast %cst_83 : f32 to vector<8x128xf32>
    %158 = arith.mulf %157, %156 : vector<8x128xf32>
    %cst_84 = arith.constant 5.000000e-01 : f32
    %159 = vector.broadcast %cst_84 : f32 to vector<8x128xf32>
    %160 = arith.addf %158, %159 : vector<8x128xf32>
    %161 = vector.extract_strided_slice %144 {offsets = [0, 256], sizes = [8, 128], strides = [1, 1]} : vector<8x512xf32> to vector<8x128xf32>
    %162 = math.tanh %161 : vector<8x128xf32>
    %163 = vector.extract_strided_slice %144 {offsets = [0, 384], sizes = [8, 128], strides = [1, 1]} : vector<8x512xf32> to vector<8x128xf32>
    %cst_85 = arith.constant 5.000000e-01 : f32
    %164 = vector.broadcast %cst_85 : f32 to vector<8x128xf32>
    %165 = arith.mulf %164, %163 : vector<8x128xf32>
    %166 = math.tanh %165 : vector<8x128xf32>
    %cst_86 = arith.constant 5.000000e-01 : f32
    %167 = vector.broadcast %cst_86 : f32 to vector<8x128xf32>
    %168 = arith.mulf %167, %166 : vector<8x128xf32>
    %cst_87 = arith.constant 5.000000e-01 : f32
    %169 = vector.broadcast %cst_87 : f32 to vector<8x128xf32>
    %170 = arith.addf %168, %169 : vector<8x128xf32>
    %c0_88 = arith.constant 0 : index
    %c0_89 = arith.constant 0 : index
    %171 = vector.load %arg7[%c0_88, %c0_89] : memref<8x128xf32, #tpu.memory_space<vmem>>, vector<8x128xf32>
    %172 = arith.mulf %160, %171 : vector<8x128xf32>
    %173 = arith.mulf %152, %162 : vector<8x128xf32>
    %174 = arith.addf %172, %173 : vector<8x128xf32>
    %175 = math.tanh %174 : vector<8x128xf32>
    %176 = arith.mulf %170, %175 : vector<8x128xf32>
    %c0_90 = arith.constant 0 : index
    %c0_91 = arith.constant 0 : index
    %177 = vector.load %arg7[%c0_90, %c0_91] : memref<8x128xf32, #tpu.memory_space<vmem>>, vector<8x128xf32>
    tpu.vector_store %arg7[%c0_90, %c0_91], %174 {strides = array<i32>} : memref<8x128xf32, #tpu.memory_space<vmem>>, vector<8x128xf32>,
    %c0_92 = arith.constant 0 : index
    %c0_93 = arith.constant 0 : index
    %178 = vector.load %arg6[%c0_92, %c0_93] : memref<8x128xf32, #tpu.memory_space<vmem>>, vector<8x128xf32>
    tpu.vector_store %arg6[%c0_92, %c0_93], %176 {strides = array<i32>} : memref<8x128xf32, #tpu.memory_space<vmem>>, vector<8x128xf32>,
    %179 = arith.index_cast %c3_i32 : i32 to index
    %c0_94 = arith.constant 0 : index
    %c0_95 = arith.constant 0 : index
    %180 = vector.load %arg4[%179, %c0_94, %c0_95] : memref<8x8x128xf32, #tpu.memory_space<vmem>>, vector<1x8x128xf32>
    %181 = vector.shape_cast %180 : vector<1x8x128xf32> to vector<8x128xf32>
    %182 = vector.shape_cast %176 : vector<8x128xf32> to vector<1x8x128xf32>
    tpu.vector_store %arg4[%179, %c0_94, %c0_95], %182 {strides = array<i32>} : memref<8x8x128xf32, #tpu.memory_space<vmem>>, vector<1x8x128xf32>,
    %c4_i32 = arith.constant 4 : i32
    %183 = arith.index_cast %c4_i32 : i32 to index
    %c0_96 = arith.constant 0 : index
    %c0_97 = arith.constant 0 : index
    %184 = vector.load %arg2[%183, %c0_96, %c0_97] : memref<8x8x512xf32, #tpu.memory_space<vmem>>, vector<1x8x512xf32>
    %185 = vector.shape_cast %184 : vector<1x8x512xf32> to vector<8x512xf32>
    %c0_98 = arith.constant 0 : index
    %c0_99 = arith.constant 0 : index
    %186 = vector.load %arg6[%c0_98, %c0_99] : memref<8x128xf32, #tpu.memory_space<vmem>>, vector<8x128xf32>
    %c0_100 = arith.constant 0 : index
    %c0_101 = arith.constant 0 : index
    %187 = vector.load %arg5[%c0_100, %c0_101] : memref<128x512xf32, #tpu.memory_space<vmem>>, vector<128x512xf32>
    %cst_102 = arith.constant dense<0.000000e+00> : vector<8x512xf32>
    %188 = tpu.matmul %186, %187, %cst_102 {dimension_numbers = #tpu.dot_dimension_numbers<[1], [0], [0], [1], [0, 0, 1, 1], [], []>} : vector<8x128xf32>, vector<128x512xf32>, vector<8x512xf32> -> vector<8x512xf32>
    %189 = arith.addf %185, %188 : vector<8x512xf32>
    %190 = vector.extract_strided_slice %189 {offsets = [0, 0], sizes = [8, 128], strides = [1, 1]} : vector<8x512xf32> to vector<8x128xf32>
    %cst_103 = arith.constant 5.000000e-01 : f32
    %191 = vector.broadcast %cst_103 : f32 to vector<8x128xf32>
    %192 = arith.mulf %191, %190 : vector<8x128xf32>
    %193 = math.tanh %192 : vector<8x128xf32>
    %cst_104 = arith.constant 5.000000e-01 : f32
    %194 = vector.broadcast %cst_104 : f32 to vector<8x128xf32>
    %195 = arith.mulf %194, %193 : vector<8x128xf32>
    %cst_105 = arith.constant 5.000000e-01 : f32
    %196 = vector.broadcast %cst_105 : f32 to vector<8x128xf32>
    %197 = arith.addf %195, %196 : vector<8x128xf32>
    %198 = vector.extract_strided_slice %189 {offsets = [0, 128], sizes = [8, 128], strides = [1, 1]} : vector<8x512xf32> to vector<8x128xf32>
    %cst_106 = arith.constant 5.000000e-01 : f32
    %199 = vector.broadcast %cst_106 : f32 to vector<8x128xf32>
    %200 = arith.mulf %199, %198 : vector<8x128xf32>
    %201 = math.tanh %200 : vector<8x128xf32>
    %cst_107 = arith.constant 5.000000e-01 : f32
    %202 = vector.broadcast %cst_107 : f32 to vector<8x128xf32>
    %203 = arith.mulf %202, %201 : vector<8x128xf32>
    %cst_108 = arith.constant 5.000000e-01 : f32
    %204 = vector.broadcast %cst_108 : f32 to vector<8x128xf32>
    %205 = arith.addf %203, %204 : vector<8x128xf32>
    %206 = vector.extract_strided_slice %189 {offsets = [0, 256], sizes = [8, 128], strides = [1, 1]} : vector<8x512xf32> to vector<8x128xf32>
    %207 = math.tanh %206 : vector<8x128xf32>
    %208 = vector.extract_strided_slice %189 {offsets = [0, 384], sizes = [8, 128], strides = [1, 1]} : vector<8x512xf32> to vector<8x128xf32>
    %cst_109 = arith.constant 5.000000e-01 : f32
    %209 = vector.broadcast %cst_109 : f32 to vector<8x128xf32>
    %210 = arith.mulf %209, %208 : vector<8x128xf32>
    %211 = math.tanh %210 : vector<8x128xf32>
    %cst_110 = arith.constant 5.000000e-01 : f32
    %212 = vector.broadcast %cst_110 : f32 to vector<8x128xf32>
    %213 = arith.mulf %212, %211 : vector<8x128xf32>
    %cst_111 = arith.constant 5.000000e-01 : f32
    %214 = vector.broadcast %cst_111 : f32 to vector<8x128xf32>
    %215 = arith.addf %213, %214 : vector<8x128xf32>
    %c0_112 = arith.constant 0 : index
    %c0_113 = arith.constant 0 : index
    %216 = vector.load %arg7[%c0_112, %c0_113] : memref<8x128xf32, #tpu.memory_space<vmem>>, vector<8x128xf32>
    %217 = arith.mulf %205, %216 : vector<8x128xf32>
    %218 = arith.mulf %197, %207 : vector<8x128xf32>
    %219 = arith.addf %217, %218 : vector<8x128xf32>
    %220 = math.tanh %219 : vector<8x128xf32>
    %221 = arith.mulf %215, %220 : vector<8x128xf32>
    %c0_114 = arith.constant 0 : index
    %c0_115 = arith.constant 0 : index
    %222 = vector.load %arg7[%c0_114, %c0_115] : memref<8x128xf32, #tpu.memory_space<vmem>>, vector<8x128xf32>
    tpu.vector_store %arg7[%c0_114, %c0_115], %219 {strides = array<i32>} : memref<8x128xf32, #tpu.memory_space<vmem>>, vector<8x128xf32>,
    %c0_116 = arith.constant 0 : index
    %c0_117 = arith.constant 0 : index
    %223 = vector.load %arg6[%c0_116, %c0_117] : memref<8x128xf32, #tpu.memory_space<vmem>>, vector<8x128xf32>
    tpu.vector_store %arg6[%c0_116, %c0_117], %221 {strides = array<i32>} : memref<8x128xf32, #tpu.memory_space<vmem>>, vector<8x128xf32>,
    %224 = arith.index_cast %c4_i32 : i32 to index
    %c0_118 = arith.constant 0 : index
    %c0_119 = arith.constant 0 : index
    %225 = vector.load %arg4[%224, %c0_118, %c0_119] : memref<8x8x128xf32, #tpu.memory_space<vmem>>, vector<1x8x128xf32>
    %226 = vector.shape_cast %225 : vector<1x8x128xf32> to vector<8x128xf32>
    %227 = vector.shape_cast %221 : vector<8x128xf32> to vector<1x8x128xf32>
    tpu.vector_store %arg4[%224, %c0_118, %c0_119], %227 {strides = array<i32>} : memref<8x8x128xf32, #tpu.memory_space<vmem>>, vector<1x8x128xf32>,
    %c5_i32 = arith.constant 5 : i32
    %228 = arith.index_cast %c5_i32 : i32 to index
    %c0_120 = arith.constant 0 : index
    %c0_121 = arith.constant 0 : index
    %229 = vector.load %arg2[%228, %c0_120, %c0_121] : memref<8x8x512xf32, #tpu.memory_space<vmem>>, vector<1x8x512xf32>
    %230 = vector.shape_cast %229 : vector<1x8x512xf32> to vector<8x512xf32>
    %c0_122 = arith.constant 0 : index
    %c0_123 = arith.constant 0 : index
    %231 = vector.load %arg6[%c0_122, %c0_123] : memref<8x128xf32, #tpu.memory_space<vmem>>, vector<8x128xf32>
    %c0_124 = arith.constant 0 : index
    %c0_125 = arith.constant 0 : index
    %232 = vector.load %arg5[%c0_124, %c0_125] : memref<128x512xf32, #tpu.memory_space<vmem>>, vector<128x512xf32>
    %cst_126 = arith.constant dense<0.000000e+00> : vector<8x512xf32>
    %233 = tpu.matmul %231, %232, %cst_126 {dimension_numbers = #tpu.dot_dimension_numbers<[1], [0], [0], [1], [0, 0, 1, 1], [], []>} : vector<8x128xf32>, vector<128x512xf32>, vector<8x512xf32> -> vector<8x512xf32>
    %234 = arith.addf %230, %233 : vector<8x512xf32>
    %235 = vector.extract_strided_slice %234 {offsets = [0, 0], sizes = [8, 128], strides = [1, 1]} : vector<8x512xf32> to vector<8x128xf32>
    %cst_127 = arith.constant 5.000000e-01 : f32
    %236 = vector.broadcast %cst_127 : f32 to vector<8x128xf32>
    %237 = arith.mulf %236, %235 : vector<8x128xf32>
    %238 = math.tanh %237 : vector<8x128xf32>
    %cst_128 = arith.constant 5.000000e-01 : f32
    %239 = vector.broadcast %cst_128 : f32 to vector<8x128xf32>
    %240 = arith.mulf %239, %238 : vector<8x128xf32>
    %cst_129 = arith.constant 5.000000e-01 : f32
    %241 = vector.broadcast %cst_129 : f32 to vector<8x128xf32>
    %242 = arith.addf %240, %241 : vector<8x128xf32>
    %243 = vector.extract_strided_slice %234 {offsets = [0, 128], sizes = [8, 128], strides = [1, 1]} : vector<8x512xf32> to vector<8x128xf32>
    %cst_130 = arith.constant 5.000000e-01 : f32
    %244 = vector.broadcast %cst_130 : f32 to vector<8x128xf32>
    %245 = arith.mulf %244, %243 : vector<8x128xf32>
    %246 = math.tanh %245 : vector<8x128xf32>
    %cst_131 = arith.constant 5.000000e-01 : f32
    %247 = vector.broadcast %cst_131 : f32 to vector<8x128xf32>
    %248 = arith.mulf %247, %246 : vector<8x128xf32>
    %cst_132 = arith.constant 5.000000e-01 : f32
    %249 = vector.broadcast %cst_132 : f32 to vector<8x128xf32>
    %250 = arith.addf %248, %249 : vector<8x128xf32>
    %251 = vector.extract_strided_slice %234 {offsets = [0, 256], sizes = [8, 128], strides = [1, 1]} : vector<8x512xf32> to vector<8x128xf32>
    %252 = math.tanh %251 : vector<8x128xf32>
    %253 = vector.extract_strided_slice %234 {offsets = [0, 384], sizes = [8, 128], strides = [1, 1]} : vector<8x512xf32> to vector<8x128xf32>
    %cst_133 = arith.constant 5.000000e-01 : f32
    %254 = vector.broadcast %cst_133 : f32 to vector<8x128xf32>
    %255 = arith.mulf %254, %253 : vector<8x128xf32>
    %256 = math.tanh %255 : vector<8x128xf32>
    %cst_134 = arith.constant 5.000000e-01 : f32
    %257 = vector.broadcast %cst_134 : f32 to vector<8x128xf32>
    %258 = arith.mulf %257, %256 : vector<8x128xf32>
    %cst_135 = arith.constant 5.000000e-01 : f32
    %259 = vector.broadcast %cst_135 : f32 to vector<8x128xf32>
    %260 = arith.addf %258, %259 : vector<8x128xf32>
    %c0_136 = arith.constant 0 : index
    %c0_137 = arith.constant 0 : index
    %261 = vector.load %arg7[%c0_136, %c0_137] : memref<8x128xf32, #tpu.memory_space<vmem>>, vector<8x128xf32>
    %262 = arith.mulf %250, %261 : vector<8x128xf32>
    %263 = arith.mulf %242, %252 : vector<8x128xf32>
    %264 = arith.addf %262, %263 : vector<8x128xf32>
    %265 = math.tanh %264 : vector<8x128xf32>
    %266 = arith.mulf %260, %265 : vector<8x128xf32>
    %c0_138 = arith.constant 0 : index
    %c0_139 = arith.constant 0 : index
    %267 = vector.load %arg7[%c0_138, %c0_139] : memref<8x128xf32, #tpu.memory_space<vmem>>, vector<8x128xf32>
    tpu.vector_store %arg7[%c0_138, %c0_139], %264 {strides = array<i32>} : memref<8x128xf32, #tpu.memory_space<vmem>>, vector<8x128xf32>,
    %c0_140 = arith.constant 0 : index
    %c0_141 = arith.constant 0 : index
    %268 = vector.load %arg6[%c0_140, %c0_141] : memref<8x128xf32, #tpu.memory_space<vmem>>, vector<8x128xf32>
    tpu.vector_store %arg6[%c0_140, %c0_141], %266 {strides = array<i32>} : memref<8x128xf32, #tpu.memory_space<vmem>>, vector<8x128xf32>,
    %269 = arith.index_cast %c5_i32 : i32 to index
    %c0_142 = arith.constant 0 : index
    %c0_143 = arith.constant 0 : index
    %270 = vector.load %arg4[%269, %c0_142, %c0_143] : memref<8x8x128xf32, #tpu.memory_space<vmem>>, vector<1x8x128xf32>
    %271 = vector.shape_cast %270 : vector<1x8x128xf32> to vector<8x128xf32>
    %272 = vector.shape_cast %266 : vector<8x128xf32> to vector<1x8x128xf32>
    tpu.vector_store %arg4[%269, %c0_142, %c0_143], %272 {strides = array<i32>} : memref<8x8x128xf32, #tpu.memory_space<vmem>>, vector<1x8x128xf32>,
    %c6_i32 = arith.constant 6 : i32
    %273 = arith.index_cast %c6_i32 : i32 to index
    %c0_144 = arith.constant 0 : index
    %c0_145 = arith.constant 0 : index
    %274 = vector.load %arg2[%273, %c0_144, %c0_145] : memref<8x8x512xf32, #tpu.memory_space<vmem>>, vector<1x8x512xf32>
    %275 = vector.shape_cast %274 : vector<1x8x512xf32> to vector<8x512xf32>
    %c0_146 = arith.constant 0 : index
    %c0_147 = arith.constant 0 : index
    %276 = vector.load %arg6[%c0_146, %c0_147] : memref<8x128xf32, #tpu.memory_space<vmem>>, vector<8x128xf32>
    %c0_148 = arith.constant 0 : index
    %c0_149 = arith.constant 0 : index
    %277 = vector.load %arg5[%c0_148, %c0_149] : memref<128x512xf32, #tpu.memory_space<vmem>>, vector<128x512xf32>
    %cst_150 = arith.constant dense<0.000000e+00> : vector<8x512xf32>
    %278 = tpu.matmul %276, %277, %cst_150 {dimension_numbers = #tpu.dot_dimension_numbers<[1], [0], [0], [1], [0, 0, 1, 1], [], []>} : vector<8x128xf32>, vector<128x512xf32>, vector<8x512xf32> -> vector<8x512xf32>
    %279 = arith.addf %275, %278 : vector<8x512xf32>
    %280 = vector.extract_strided_slice %279 {offsets = [0, 0], sizes = [8, 128], strides = [1, 1]} : vector<8x512xf32> to vector<8x128xf32>
    %cst_151 = arith.constant 5.000000e-01 : f32
    %281 = vector.broadcast %cst_151 : f32 to vector<8x128xf32>
    %282 = arith.mulf %281, %280 : vector<8x128xf32>
    %283 = math.tanh %282 : vector<8x128xf32>
    %cst_152 = arith.constant 5.000000e-01 : f32
    %284 = vector.broadcast %cst_152 : f32 to vector<8x128xf32>
    %285 = arith.mulf %284, %283 : vector<8x128xf32>
    %cst_153 = arith.constant 5.000000e-01 : f32
    %286 = vector.broadcast %cst_153 : f32 to vector<8x128xf32>
    %287 = arith.addf %285, %286 : vector<8x128xf32>
    %288 = vector.extract_strided_slice %279 {offsets = [0, 128], sizes = [8, 128], strides = [1, 1]} : vector<8x512xf32> to vector<8x128xf32>
    %cst_154 = arith.constant 5.000000e-01 : f32
    %289 = vector.broadcast %cst_154 : f32 to vector<8x128xf32>
    %290 = arith.mulf %289, %288 : vector<8x128xf32>
    %291 = math.tanh %290 : vector<8x128xf32>
    %cst_155 = arith.constant 5.000000e-01 : f32
    %292 = vector.broadcast %cst_155 : f32 to vector<8x128xf32>
    %293 = arith.mulf %292, %291 : vector<8x128xf32>
    %cst_156 = arith.constant 5.000000e-01 : f32
    %294 = vector.broadcast %cst_156 : f32 to vector<8x128xf32>
    %295 = arith.addf %293, %294 : vector<8x128xf32>
    %296 = vector.extract_strided_slice %279 {offsets = [0, 256], sizes = [8, 128], strides = [1, 1]} : vector<8x512xf32> to vector<8x128xf32>
    %297 = math.tanh %296 : vector<8x128xf32>
    %298 = vector.extract_strided_slice %279 {offsets = [0, 384], sizes = [8, 128], strides = [1, 1]} : vector<8x512xf32> to vector<8x128xf32>
    %cst_157 = arith.constant 5.000000e-01 : f32
    %299 = vector.broadcast %cst_157 : f32 to vector<8x128xf32>
    %300 = arith.mulf %299, %298 : vector<8x128xf32>
    %301 = math.tanh %300 : vector<8x128xf32>
    %cst_158 = arith.constant 5.000000e-01 : f32
    %302 = vector.broadcast %cst_158 : f32 to vector<8x128xf32>
    %303 = arith.mulf %302, %301 : vector<8x128xf32>
    %cst_159 = arith.constant 5.000000e-01 : f32
    %304 = vector.broadcast %cst_159 : f32 to vector<8x128xf32>
    %305 = arith.addf %303, %304 : vector<8x128xf32>
    %c0_160 = arith.constant 0 : index
    %c0_161 = arith.constant 0 : index
    %306 = vector.load %arg7[%c0_160, %c0_161] : memref<8x128xf32, #tpu.memory_space<vmem>>, vector<8x128xf32>
    %307 = arith.mulf %295, %306 : vector<8x128xf32>
    %308 = arith.mulf %287, %297 : vector<8x128xf32>
    %309 = arith.addf %307, %308 : vector<8x128xf32>
    %310 = math.tanh %309 : vector<8x128xf32>
    %311 = arith.mulf %305, %310 : vector<8x128xf32>
    %c0_162 = arith.constant 0 : index
    %c0_163 = arith.constant 0 : index
    %312 = vector.load %arg7[%c0_162, %c0_163] : memref<8x128xf32, #tpu.memory_space<vmem>>, vector<8x128xf32>
    tpu.vector_store %arg7[%c0_162, %c0_163], %309 {strides = array<i32>} : memref<8x128xf32, #tpu.memory_space<vmem>>, vector<8x128xf32>,
    %c0_164 = arith.constant 0 : index
    %c0_165 = arith.constant 0 : index
    %313 = vector.load %arg6[%c0_164, %c0_165] : memref<8x128xf32, #tpu.memory_space<vmem>>, vector<8x128xf32>
    tpu.vector_store %arg6[%c0_164, %c0_165], %311 {strides = array<i32>} : memref<8x128xf32, #tpu.memory_space<vmem>>, vector<8x128xf32>,
    %314 = arith.index_cast %c6_i32 : i32 to index
    %c0_166 = arith.constant 0 : index
    %c0_167 = arith.constant 0 : index
    %315 = vector.load %arg4[%314, %c0_166, %c0_167] : memref<8x8x128xf32, #tpu.memory_space<vmem>>, vector<1x8x128xf32>
    %316 = vector.shape_cast %315 : vector<1x8x128xf32> to vector<8x128xf32>
    %317 = vector.shape_cast %311 : vector<8x128xf32> to vector<1x8x128xf32>
    tpu.vector_store %arg4[%314, %c0_166, %c0_167], %317 {strides = array<i32>} : memref<8x8x128xf32, #tpu.memory_space<vmem>>, vector<1x8x128xf32>,
    %c7_i32 = arith.constant 7 : i32
    %318 = arith.index_cast %c7_i32 : i32 to index
    %c0_168 = arith.constant 0 : index
    %c0_169 = arith.constant 0 : index
    %319 = vector.load %arg2[%318, %c0_168, %c0_169] : memref<8x8x512xf32, #tpu.memory_space<vmem>>, vector<1x8x512xf32>
    %320 = vector.shape_cast %319 : vector<1x8x512xf32> to vector<8x512xf32>
    %c0_170 = arith.constant 0 : index
    %c0_171 = arith.constant 0 : index
    %321 = vector.load %arg6[%c0_170, %c0_171] : memref<8x128xf32, #tpu.memory_space<vmem>>, vector<8x128xf32>
    %c0_172 = arith.constant 0 : index
    %c0_173 = arith.constant 0 : index
    %322 = vector.load %arg5[%c0_172, %c0_173] : memref<128x512xf32, #tpu.memory_space<vmem>>, vector<128x512xf32>
    %cst_174 = arith.constant dense<0.000000e+00> : vector<8x512xf32>
    %323 = tpu.matmul %321, %322, %cst_174 {dimension_numbers = #tpu.dot_dimension_numbers<[1], [0], [0], [1], [0, 0, 1, 1], [], []>} : vector<8x128xf32>, vector<128x512xf32>, vector<8x512xf32> -> vector<8x512xf32>
    %324 = arith.addf %320, %323 : vector<8x512xf32>
    %325 = vector.extract_strided_slice %324 {offsets = [0, 0], sizes = [8, 128], strides = [1, 1]} : vector<8x512xf32> to vector<8x128xf32>
    %cst_175 = arith.constant 5.000000e-01 : f32
    %326 = vector.broadcast %cst_175 : f32 to vector<8x128xf32>
    %327 = arith.mulf %326, %325 : vector<8x128xf32>
    %328 = math.tanh %327 : vector<8x128xf32>
    %cst_176 = arith.constant 5.000000e-01 : f32
    %329 = vector.broadcast %cst_176 : f32 to vector<8x128xf32>
    %330 = arith.mulf %329, %328 : vector<8x128xf32>
    %cst_177 = arith.constant 5.000000e-01 : f32
    %331 = vector.broadcast %cst_177 : f32 to vector<8x128xf32>
    %332 = arith.addf %330, %331 : vector<8x128xf32>
    %333 = vector.extract_strided_slice %324 {offsets = [0, 128], sizes = [8, 128], strides = [1, 1]} : vector<8x512xf32> to vector<8x128xf32>
    %cst_178 = arith.constant 5.000000e-01 : f32
    %334 = vector.broadcast %cst_178 : f32 to vector<8x128xf32>
    %335 = arith.mulf %334, %333 : vector<8x128xf32>
    %336 = math.tanh %335 : vector<8x128xf32>
    %cst_179 = arith.constant 5.000000e-01 : f32
    %337 = vector.broadcast %cst_179 : f32 to vector<8x128xf32>
    %338 = arith.mulf %337, %336 : vector<8x128xf32>
    %cst_180 = arith.constant 5.000000e-01 : f32
    %339 = vector.broadcast %cst_180 : f32 to vector<8x128xf32>
    %340 = arith.addf %338, %339 : vector<8x128xf32>
    %341 = vector.extract_strided_slice %324 {offsets = [0, 256], sizes = [8, 128], strides = [1, 1]} : vector<8x512xf32> to vector<8x128xf32>
    %342 = math.tanh %341 : vector<8x128xf32>
    %343 = vector.extract_strided_slice %324 {offsets = [0, 384], sizes = [8, 128], strides = [1, 1]} : vector<8x512xf32> to vector<8x128xf32>
    %cst_181 = arith.constant 5.000000e-01 : f32
    %344 = vector.broadcast %cst_181 : f32 to vector<8x128xf32>
    %345 = arith.mulf %344, %343 : vector<8x128xf32>
    %346 = math.tanh %345 : vector<8x128xf32>
    %cst_182 = arith.constant 5.000000e-01 : f32
    %347 = vector.broadcast %cst_182 : f32 to vector<8x128xf32>
    %348 = arith.mulf %347, %346 : vector<8x128xf32>
    %cst_183 = arith.constant 5.000000e-01 : f32
    %349 = vector.broadcast %cst_183 : f32 to vector<8x128xf32>
    %350 = arith.addf %348, %349 : vector<8x128xf32>
    %c0_184 = arith.constant 0 : index
    %c0_185 = arith.constant 0 : index
    %351 = vector.load %arg7[%c0_184, %c0_185] : memref<8x128xf32, #tpu.memory_space<vmem>>, vector<8x128xf32>
    %352 = arith.mulf %340, %351 : vector<8x128xf32>
    %353 = arith.mulf %332, %342 : vector<8x128xf32>
    %354 = arith.addf %352, %353 : vector<8x128xf32>
    %355 = math.tanh %354 : vector<8x128xf32>
    %356 = arith.mulf %350, %355 : vector<8x128xf32>
    %c0_186 = arith.constant 0 : index
    %c0_187 = arith.constant 0 : index
    %357 = vector.load %arg7[%c0_186, %c0_187] : memref<8x128xf32, #tpu.memory_space<vmem>>, vector<8x128xf32>
    tpu.vector_store %arg7[%c0_186, %c0_187], %354 {strides = array<i32>} : memref<8x128xf32, #tpu.memory_space<vmem>>, vector<8x128xf32>,
    %c0_188 = arith.constant 0 : index
    %c0_189 = arith.constant 0 : index
    %358 = vector.load %arg6[%c0_188, %c0_189] : memref<8x128xf32, #tpu.memory_space<vmem>>, vector<8x128xf32>
    tpu.vector_store %arg6[%c0_188, %c0_189], %356 {strides = array<i32>} : memref<8x128xf32, #tpu.memory_space<vmem>>, vector<8x128xf32>,
    %359 = arith.index_cast %c7_i32 : i32 to index
    %c0_190 = arith.constant 0 : index
    %c0_191 = arith.constant 0 : index
    %360 = vector.load %arg4[%359, %c0_190, %c0_191] : memref<8x8x128xf32, #tpu.memory_space<vmem>>, vector<1x8x128xf32>
    %361 = vector.shape_cast %360 : vector<1x8x128xf32> to vector<8x128xf32>
    %362 = vector.shape_cast %356 : vector<8x128xf32> to vector<1x8x128xf32>
    tpu.vector_store %arg4[%359, %c0_190, %c0_191], %362 {strides = array<i32>} : memref<8x8x128xf32, #tpu.memory_space<vmem>>, vector<1x8x128xf32>,
    %c8_i32 = arith.constant 8 : i32
    return
  }
  func.func @transform_0(%arg0: i32, %arg1: i32) -> (i32, i32, i32) {
    %c0_i32 = arith.constant 0 : i32
    %c0_i32_0 = arith.constant 0 : i32
    return %arg1, %arg0, %c0_i32 : i32, i32, i32
  }
  func.func @transform_2(%arg0: i32, %arg1: i32) -> (i32, i32, i32) {
    %c0_i32 = arith.constant 0 : i32
    %c0_i32_0 = arith.constant 0 : i32
    return %arg1, %arg0, %c0_i32 : i32, i32, i32
  }
}

</mosaic_0001>

<llo_original>
// kernel: tpu_custom_call.1
$region0: #{tpu_custom_call.1}
  #allocation0 [shape = 'u32[]', space=smem, size = 0x4, offset = 0x4, fixed_abs, tag = 'smem constant byte address 0x4 - core index']
  #allocation1 [shape = 'u32[144,128]{1,0:T(1,128)}', space=vmem, size = 0x12000, scoped, tag = 'internal scratch']
  #allocation2 [shape = 'f32[128,512]{1,0:T(8,128)}', space=vmem, size = 0x40000, scoped, tag = 'scratch operand']
  #allocation3 [shape = 'f32[8,128]{1,0:T(8,128)}', space=vmem, size = 0x1000, scoped, tag = 'scratch operand']
  #allocation4 [shape = 'f32[8,128]{1,0:T(8,128)}', space=vmem, size = 0x1000, scoped, tag = 'scratch operand']
  #allocation10 [shape = 's32[]', space=sflag, size = 0x4, offset = 0, fixed_abs, tag = 'sflag constant byte address 0x0 - dummy sync flag']
  #allocation11 [shape = 's32[]', space=sflag, size = 0x4, offset = 0, fixed_abs, tag = 'sflag constant byte address 0x0 - dummy sync flag']
  #allocation12 [shape = 'u32[]', space=smem, size = 0x4, offset = 0x44, fixed_abs, tag = 'smem constant byte address 0x44 - assertion arg 0']
  #allocation13 [shape = 'u32[]', space=smem, size = 0x4, offset = 0x48, fixed_abs, tag = 'smem constant byte address 0x48 - assertion arg 1']
  %s0 = inlined_call_operand.hbm [shape: f32[8,8,512], index: 0, kind: input, shape index: {}]
  %s1 = inlined_call_operand.hbm [shape: f32[128,512], index: 1, kind: input, shape index: {}]
  %s2 = inlined_call_operand.hbm [shape: f32[8,8,128], index: 2, kind: output, shape index: {}]
  %s3 = sld [smem:[#allocation0]]
  $region27: #{tpu_custom_call.1} parent=0
    _
  %s5 = ssub.s32 1, %s3
  %s6 = scalar_select 0, %s5, %s3
  $region1: #{tpu_custom_call.1} parent=0
    #allocation5 [shape = 'u8[131072]{0}', space=vmem, size = 0x20000, scoped, tag = 'input window, operand 0, single buffered']
    #allocation6 [shape = 's32[1]{0}', space=sflag, size = 0x4, scoped, tag = 'scoped memory for tpu_custom_call.1']
    #allocation7 [shape = 's32[1]{0}', space=sflag, size = 0x4, scoped, tag = 'scoped memory for tpu_custom_call.1']
    #allocation8 [shape = 'u8[32768]{0}', space=vmem, size = 0x8000, scoped, tag = 'output window, operand 0, single buffered']
    %7 = vsyncpa [#allocation6], 0
    %8 = vsyncpa [#allocation7], 0
    // Predicated region
    $region2: #{tpu_custom_call.1} parent=1 // pred_check
      _
    $region3: #{tpu_custom_call.1} parent=1 // pred_check_branch
      %10 = sbr.rel (0) target = $region5
    $region4: #{tpu_custom_call.1} parent=1 // pred_region
      %s12 = ssub.s32 4096, 4096
      %13 = vsyncadd [#allocation6], %s12
      %s14 = sshll.u32 [#allocation5], 4
      %s15 = int_to_ptr.vmem [resolvable:$true] %s14
      %20 = dma.hbm_to_vmem [thread:$0]  %s0, 4096, %s15, [#allocation6], 512, 512, 32
    $region5: #{tpu_custom_call.1} parent=1 // pred_fallthru
      _
    // Predicated region
    $region6: #{tpu_custom_call.1} parent=1 // pred_check
      _
    $region7: #{tpu_custom_call.1} parent=1 // pred_check_branch
      %22 = sbr.rel (0) target = $region9
    $region8: #{tpu_custom_call.1} parent=1 // pred_region
      %23 = dma.done [#allocation6], 4096
    $region9: #{tpu_custom_call.1} parent=1 // pred_fallthru
      _
    %p24 = scmp.eq.s32.totalorder 0, 0
    // Predicated region
    $region10: #{tpu_custom_call.1} parent=1 // pred_check
      %p25 = pneg %p24
    $region11: #{tpu_custom_call.1} parent=1 // pred_check_branch
      %27 = sbr.rel (%p25) target = $region13
    $region12: #{tpu_custom_call.1} parent=1 // pred_region
      $region14: #{tpu_custom_call.1} parent=12
        #allocation9 [shape = 's32[1]{0}', space=sflag, size = 0x4, scoped, tag = 'scoped memory for tpu_custom_call.1']
        // Predicated region
        $region15: #{tpu_custom_call.1} parent=14 // pred_check
          _
        $region16: #{tpu_custom_call.1} parent=14 // pred_check_branch
          %29 = sbr.rel target = $region18
        $region17: #{tpu_custom_call.1} parent=14 // pred_region
          %30 = sst [smem:[#allocation12]] [#allocation11]
          %31 = sst [smem:[#allocation13]] [#allocation10]
        $region18: #{tpu_custom_call.1} parent=14 // pred_fallthru
          _
        %33 = shalt.err (0)
        %s35 = sshll.u32 [#allocation2], 4
        %s36 = int_to_ptr.vmem [resolvable:$true] %s35
        %38 = dma.hbm_to_vmem [thread:$0]  %s1, 8192, %s36, [#allocation9]
        %s39 = smul.u32 8, 16
        %s40 = smul.u32 %s39, 4
        %s41 = sshll.u32 %s40, 4
        %42 = dma.done [#allocation9], %s41
      %43 = vst [vmem:[#allocation3] sm:$0xff] 0.0
      %44 = vst [vmem:[#allocation4] sm:$0xff] 0.0
    $region13: #{tpu_custom_call.1} parent=1 // pred_fallthru
      _
    %v45 = vld [vmem:[#allocation5] sm:$0xff]
    %v46 = vld [vmem:[#allocation5 + $0x8] sm:$0xff]
    %v47 = vld [vmem:[#allocation5 + $0x10] sm:$0xff]
    %v48 = vld [vmem:[#allocation5 + $0x18] sm:$0xff]
    %v49 = vld [vmem:[#allocation3] sm:$0xff]
    %v50 = vld [vmem:[#allocation2] sm:$0xff]
    %v51 = vld [vmem:[#allocation2 + $0x8] sm:$0xff]
    %v52 = vld [vmem:[#allocation2 + $0x10] sm:$0xff]
    %v53 = vld [vmem:[#allocation2 + $0x18] sm:$0xff]
    %v54 = vld [vmem:[#allocation2 + $0x20] sm:$0xff]
    %v55 = vld [vmem:[#allocation2 + $0x28] sm:$0xff]
    %v56 = vld [vmem:[#allocation2 + $0x30] sm:$0xff]
    %v57 = vld [vmem:[#allocation2 + $0x38] sm:$0xff]
    %v58 = vld [vmem:[#allocation2 + $0x40] sm:$0xff]
    %v59 = vld [vmem:[#allocation2 + $0x48] sm:$0xff]
    %v60 = vld [vmem:[#allocation2 + $0x50] sm:$0xff]
    %v61 = vld [vmem:[#allocation2 + $0x58] sm:$0xff]
    %v62 = vld [vmem:[#allocation2 + $0x60] sm:$0xff]
    %v63 = vld [vmem:[#allocation2 + $0x68] sm:$0xff]
    %v64 = vld [vmem:[#allocation2 + $0x70] sm:$0xff]
    %v65 = vld [vmem:[#allocation2 + $0x78] sm:$0xff]
    %v66 = vld [vmem:[#allocation2 + $0x80] sm:$0xff]
    %v67 = vld [vmem:[#allocation2 + $0x88] sm:$0xff]
    %v68 = vld [vmem:[#allocation2 + $0x90] sm:$0xff]
    %v69 = vld [vmem:[#allocation2 + $0x98] sm:$0xff]
    %v70 = vld [vmem:[#allocation2 + $0xa0] sm:$0xff]
    %v71 = vld [vmem:[#allocation2 + $0xa8] sm:$0xff]
    %v72 = vld [vmem:[#allocation2 + $0xb0] sm:$0xff]
    %v73 = vld [vmem:[#allocation2 + $0xb8] sm:$0xff]
    %v74 = vld [vmem:[#allocation2 + $0xc0] sm:$0xff]
    %v75 = vld [vmem:[#allocation2 + $0xc8] sm:$0xff]
    %v76 = vld [vmem:[#allocation2 + $0xd0] sm:$0xff]
    %v77 = vld [vmem:[#allocation2 + $0xd8] sm:$0xff]
    %v78 = vld [vmem:[#allocation2 + $0xe0] sm:$0xff]
    %v79 = vld [vmem:[#allocation2 + $0xe8] sm:$0xff]
    %v80 = vld [vmem:[#allocation2 + $0xf0] sm:$0xff]
    %v81 = vld [vmem:[#allocation2 + $0xf8] sm:$0xff]
    %v82 = vld [vmem:[#allocation2 + $0x100] sm:$0xff]
    %v83 = vld [vmem:[#allocation2 + $0x108] sm:$0xff]
    %v84 = vld [vmem:[#allocation2 + $0x110] sm:$0xff]
    %v85 = vld [vmem:[#allocation2 + $0x118] sm:$0xff]
    %v86 = vld [vmem:[#allocation2 + $0x120] sm:$0xff]
    %v87 = vld [vmem:[#allocation2 + $0x128] sm:$0xff]
    %v88 = vld [vmem:[#allocation2 + $0x130] sm:$0xff]
    %v89 = vld [vmem:[#allocation2 + $0x138] sm:$0xff]
    %v90 = vld [vmem:[#allocation2 + $0x140] sm:$0xff]
    %v91 = vld [vmem:[#allocation2 + $0x148] sm:$0xff]
    %v92 = vld [vmem:[#allocation2 + $0x150] sm:$0xff]
    %v93 = vld [vmem:[#allocation2 + $0x158] sm:$0xff]
    %v94 = vld [vmem:[#allocation2 + $0x160] sm:$0xff]
    %v95 = vld [vmem:[#allocation2 + $0x168] sm:$0xff]
    %v96 = vld [vmem:[#allocation2 + $0x170] sm:$0xff]
    %v97 = vld [vmem:[#allocation2 + $0x178] sm:$0xff]
    %v98 = vld [vmem:[#allocation2 + $0x180] sm:$0xff]
    %v99 = vld [vmem:[#allocation2 + $0x188] sm:$0xff]
    %v100 = vld [vmem:[#allocation2 + $0x190] sm:$0xff]
    %v101 = vld [vmem:[#allocation2 + $0x198] sm:$0xff]
    %v102 = vld [vmem:[#allocation2 + $0x1a0] sm:$0xff]
    %v103 = vld [vmem:[#allocation2 + $0x1a8] sm:$0xff]
    %v104 = vld [vmem:[#allocation2 + $0x1b0] sm:$0xff]
    %v105 = vld [vmem:[#allocation2 + $0x1b8] sm:$0xff]
    %v106 = vld [vmem:[#allocation2 + $0x1c0] sm:$0xff]
    %v107 = vld [vmem:[#allocation2 + $0x1c8] sm:$0xff]
    %v108 = vld [vmem:[#allocation2 + $0x1d0] sm:$0xff]
    %v109 = vld [vmem:[#allocation2 + $0x1d8] sm:$0xff]
    %v110 = vld [vmem:[#allocation2 + $0x1e0] sm:$0xff]
    %v111 = vld [vmem:[#allocation2 + $0x1e8] sm:$0xff]
    %v112 = vld [vmem:[#allocation2 + $0x1f0] sm:$0xff]
    %v113 = vld [vmem:[#allocation2 + $0x1f8] sm:$0xff]
    %114 = vmatprep.subr.mxu0 %v51
    %115 = vmatpush1.msra.mxu0 %v50
    %116 = vmatprep.subr.mxu0 %v55
    %117 = vmatpush1.msra.mxu0 %v54
    %118 = vmatprep.subr.mxu0 %v59
    %119 = vmatpush1.msra.mxu0 %v58
    %120 = vmatprep.subr.mxu0 %v63
    %121 = vmatpush1.msra.mxu0 %v62
    %122 = vmatprep.subr.mxu0 %v67
    %123 = vmatpush1.msra.mxu0 %v66
    %124 = vmatprep.subr.mxu0 %v71
    %125 = vmatpush1.msra.mxu0 %v70
    %126 = vmatprep.subr.mxu0 %v75
    %127 = vmatpush1.msra.mxu0 %v74
    %128 = vmatprep.subr.mxu0 %v79
    %129 = vmatpush1.msra.mxu0 %v78
    %130 = vmatprep.subr.mxu0 %v83
    %131 = vmatpush1.msra.mxu0 %v82
    %132 = vmatprep.subr.mxu0 %v87
    %133 = vmatpush1.msra.mxu0 %v86
    %134 = vmatprep.subr.mxu0 %v91
    %135 = vmatpush1.msra.mxu0 %v90
    %136 = vmatprep.subr.mxu0 %v95
    %137 = vmatpush1.msra.mxu0 %v94
    %138 = vmatprep.subr.mxu0 %v99
    %139 = vmatpush1.msra.mxu0 %v98
    %140 = vmatprep.subr.mxu0 %v103
    %141 = vmatpush1.msra.mxu0 %v102
    %142 = vmatprep.subr.mxu0 %v107
    %143 = vmatpush1.msra.mxu0 %v106
    %144 = vmatprep.subr.mxu0 %v111
    %145 = vmatpush1.msra.mxu0 %v110
    %146 = vmatprep.subr.mxu0 0.0
    %147 = vmatpush1.msra.mxu0 0.0
    %148 = vmatprep.subr.mxu0 0.0
    %149 = vmatpush1.msra.mxu0 0.0
    %150 = vmatprep.subr.mxu0 0.0
    %151 = vmatpush1.msra.mxu0 0.0
    %152 = vmatprep.subr.mxu0 0.0
    %153 = vmatpush1.msra.mxu0 0.0
    %154 = vmatprep.subr.mxu0 0.0
    %155 = vmatpush1.msra.mxu0 0.0
    %156 = vmatprep.subr.mxu0 0.0
    %157 = vmatpush1.msra.mxu0 0.0
    %158 = vmatprep.subr.mxu0 0.0
    %159 = vmatpush1.msra.mxu0 0.0
    %160 = vmatprep.subr.mxu0 0.0
    %161 = vmatpush1.msra.mxu0 0.0
    %162 = vmatprep.subr.mxu0 0.0
    %163 = vmatpush1.msra.mxu0 0.0
    %164 = vmatprep.subr.mxu0 0.0
    %165 = vmatpush1.msra.mxu0 0.0
    %166 = vmatprep.subr.mxu0 0.0
    %167 = vmatpush1.msra.mxu0 0.0
    %168 = vmatprep.subr.mxu0 0.0
    %169 = vmatpush1.msra.mxu0 0.0
    %170 = vmatprep.subr.mxu0 0.0
    %171 = vmatpush1.msra.mxu0 0.0
    %172 = vmatprep.subr.mxu0 0.0
    %173 = vmatpush1.msra.mxu0 0.0
    %174 = vmatprep.subr.mxu0 0.0
    %175 = vmatpush1.msra.mxu0 0.0
    %176 = vmatprep.subr.mxu0 0.0
    %177 = vmatpush1.msra.mxu0 0.0
    %178 = vmatprep.mubr.f32.mxu0 0.0
    %179 = vmatmul.mubr.f32.gmra.mrb[0].mxu0 %v49
    %v180 = vpop.f32.mrb[0].mxu0
    %v181 = vadd.f32 0.0, %v180
    %v182 = vpop.f32.mrb[0].mxu0
    %v183 = vadd.f32 0.0, %v182
    %184 = vdwg.mxu0
    %185 = vmatprep.subr.mxu0 %v53
    %186 = vmatpush1.msra.mxu0 %v52
    %187 = vmatprep.subr.mxu0 %v57
    %188 = vmatpush1.msra.mxu0 %v56
    %189 = vmatprep.subr.mxu0 %v61
    %190 = vmatpush1.msra.mxu0 %v60
    %191 = vmatprep.subr.mxu0 %v65
    %192 = vmatpush1.msra.mxu0 %v64
    %193 = vmatprep.subr.mxu0 %v69
    %194 = vmatpush1.msra.mxu0 %v68
    %195 = vmatprep.subr.mxu0 %v73
    %196 = vmatpush1.msra.mxu0 %v72
    %197 = vmatprep.subr.mxu0 %v77
    %198 = vmatpush1.msra.mxu0 %v76
    %199 = vmatprep.subr.mxu0 %v81
    %200 = vmatpush1.msra.mxu0 %v80
    %201 = vmatprep.subr.mxu0 %v85
    %202 = vmatpush1.msra.mxu0 %v84
    %203 = vmatprep.subr.mxu0 %v89
    %204 = vmatpush1.msra.mxu0 %v88
    %205 = vmatprep.subr.mxu0 %v93
    %206 = vmatpush1.msra.mxu0 %v92
    %207 = vmatprep.subr.mxu0 %v97
    %208 = vmatpush1.msra.mxu0 %v96
    %209 = vmatprep.subr.mxu0 %v101
    %210 = vmatpush1.msra.mxu0 %v100
    %211 = vmatprep.subr.mxu0 %v105
    %212 = vmatpush1.msra.mxu0 %v104
    %213 = vmatprep.subr.mxu0 %v109
    %214 = vmatpush1.msra.mxu0 %v108
    %215 = vmatprep.subr.mxu0 %v113
    %216 = vmatpush1.msra.mxu0 %v112
    %217 = vmatprep.subr.mxu0 0.0
    %218 = vmatpush1.msra.mxu0 0.0
    %219 = vmatprep.subr.mxu0 0.0
    %220 = vmatpush1.msra.mxu0 0.0
    %221 = vmatprep.subr.mxu0 0.0
    %222 = vmatpush1.msra.mxu0 0.0
    %223 = vmatprep.subr.mxu0 0.0
    %224 = vmatpush1.msra.mxu0 0.0
    %225 = vmatprep.subr.mxu0 0.0
    %226 = vmatpush1.msra.mxu0 0.0
    %227 = vmatprep.subr.mxu0 0.0
    %228 = vmatpush1.msra.mxu0 0.0
    %229 = vmatprep.subr.mxu0 0.0
    %230 = vmatpush1.msra.mxu0 0.0
    %231 = vmatprep.subr.mxu0 0.0
    %232 = vmatpush1.msra.mxu0 0.0
    %233 = vmatprep.subr.mxu0 0.0
    %234 = vmatpush1.msra.mxu0 0.0
    %235 = vmatprep.subr.mxu0 0.0
    %236 = vmatpush1.msra.mxu0 0.0
    %237 = vmatprep.subr.mxu0 0.0
    %238 = vmatpush1.msra.mxu0 0.0
    %239 = vmatprep.subr.mxu0 0.0
    %240 = vmatpush1.msra.mxu0 0.0
    %241 = vmatprep.subr.mxu0 0.0
    %242 = vmatpush1.msra.mxu0 0.0
    %243 = vmatprep.subr.mxu0 0.0
    %244 = vmatpush1.msra.mxu0 0.0
    %245 = vmatprep.subr.mxu0 0.0
    %246 = vmatpush1.msra.mxu0 0.0
    %247 = vmatprep.subr.mxu0 0.0
    %248 = vmatpush1.msra.mxu0 0.0
    %249 = vmatprep.mubr.f32.mxu0 0.0
    %250 = vmatmul.mubr.f32.gmra.mrb[0].mxu0 %v49
    %v251 = vpop.f32.mrb[0].mxu0
    %v252 = vadd.f32 0.0, %v251
    %v253 = vpop.f32.mrb[0].mxu0
    %v254 = vadd.f32 0.0, %v253
    %255 = vdwg.mxu0
    %v256 = vadd.f32 %v45, %v181
    %v257 = vadd.f32 %v46, %v183
    %v258 = vadd.f32 %v47, %v252
    %v259 = vadd.f32 %v48, %v254
    %v260 = vmul.f32 %v256, 0.5
    %v261 = vtanh.pop %v260
    %v262 = vmul.f32 %v261, 0.5
    %v263 = vadd.f32 %v262, 0.5
    %v264 = vmul.f32 %v257, 0.5
    %v265 = vtanh.pop %v264
    %v266 = vmul.f32 %v265, 0.5
    %v267 = vadd.f32 %v266, 0.5
    %v268 = vtanh.pop %v258
    %v269 = vmul.f32 %v259, 0.5
    %v270 = vtanh.pop %v269
    %v271 = vmul.f32 %v270, 0.5
    %v272 = vadd.f32 %v271, 0.5
    %v273 = vld [vmem:[#allocation4] sm:$0xff]
    %v274 = vmul.f32 %v267, %v273
    %v275 = vmul.f32 %v263, %v268
    %v276 = vadd.f32 %v274, %v275
    %v277 = vtanh.pop %v276
    %v278 = vmul.f32 %v272, %v277
    %279 = vst [vmem:[#allocation4] sm:$0xff] %v276
    %280 = vst [vmem:[#allocation3] sm:$0xff] %v278
    %281 = vst [vmem:[#allocation8] sm:$0xff] %v278
    %s282 = scalar_lea.vmem [#allocation5], 32
    %v283 = vld [vmem:[%s282] sm:$0xff]
    %v284 = vld [vmem:[%s282 + $0x8] sm:$0xff]
    %v285 = vld [vmem:[%s282 + $0x10] sm:$0xff]
    %v286 = vld [vmem:[%s282 + $0x18] sm:$0xff]
    %v287 = vld [vmem:[#allocation3] sm:$0xff]
    %v288 = vld [vmem:[#allocation2] sm:$0xff]
    %v289 = vld [vmem:[#allocation2 + $0x8] sm:$0xff]
    %v290 = vld [vmem:[#allocation2 + $0x10] sm:$0xff]
    %v291 = vld [vmem:[#allocation2 + $0x18] sm:$0xff]
    %v292 = vld [vmem:[#allocation2 + $0x20] sm:$0xff]
    %v293 = vld [vmem:[#allocation2 + $0x28] sm:$0xff]
    %v294 = vld [vmem:[#allocation2 + $0x30] sm:$0xff]
    %v295 = vld [vmem:[#allocation2 + $0x38] sm:$0xff]
    %v296 = vld [vmem:[#allocation2 + $0x40] sm:$0xff]
    %v297 = vld [vmem:[#allocation2 + $0x48] sm:$0xff]
    %v298 = vld [vmem:[#allocation2 + $0x50] sm:$0xff]
    %v299 = vld [vmem:[#allocation2 + $0x58] sm:$0xff]
    %v300 = vld [vmem:[#allocation2 + $0x60] sm:$0xff]
    %v301 = vld [vmem:[#allocation2 + $0x68] sm:$0xff]
    %v302 = vld [vmem:[#allocation2 + $0x70] sm:$0xff]
    %v303 = vld [vmem:[#allocation2 + $0x78] sm:$0xff]
    %v304 = vld [vmem:[#allocation2 + $0x80] sm:$0xff]
    %v305 = vld [vmem:[#allocation2 + $0x88] sm:$0xff]
    %v306 = vld [vmem:[#allocation2 + $0x90] sm:$0xff]
    %v307 = vld [vmem:[#allocation2 + $0x98] sm:$0xff]
    %v308 = vld [vmem:[#allocation2 + $0xa0] sm:$0xff]
    %v309 = vld [vmem:[#allocation2 + $0xa8] sm:$0xff]
    %v310 = vld [vmem:[#allocation2 + $0xb0] sm:$0xff]
    %v311 = vld [vmem:[#allocation2 + $0xb8] sm:$0xff]
    %v312 = vld [vmem:[#allocation2 + $0xc0] sm:$0xff]
    %v313 = vld [vmem:[#allocation2 + $0xc8] sm:$0xff]
    %v314 = vld [vmem:[#allocation2 + $0xd0] sm:$0xff]
    %v315 = vld [vmem:[#allocation2 + $0xd8] sm:$0xff]
    %v316 = vld [vmem:[#allocation2 + $0xe0] sm:$0xff]
    %v317 = vld [vmem:[#allocation2 + $0xe8] sm:$0xff]
    %v318 = vld [vmem:[#allocation2 + $0xf0] sm:$0xff]
    %v319 = vld [vmem:[#allocation2 + $0xf8] sm:$0xff]
    %v320 = vld [vmem:[#allocation2 + $0x100] sm:$0xff]
    %v321 = vld [vmem:[#allocation2 + $0x108] sm:$0xff]
    %v322 = vld [vmem:[#allocation2 + $0x110] sm:$0xff]
    %v323 = vld [vmem:[#allocation2 + $0x118] sm:$0xff]
    %v324 = vld [vmem:[#allocation2 + $0x120] sm:$0xff]
    %v325 = vld [vmem:[#allocation2 + $0x128] sm:$0xff]
    %v326 = vld [vmem:[#allocation2 + $0x130] sm:$0xff]
    %v327 = vld [vmem:[#allocation2 + $0x138] sm:$0xff]
    %v328 = vld [vmem:[#allocation2 + $0x140] sm:$0xff]
    %v329 = vld [vmem:[#allocation2 + $0x148] sm:$0xff]
    %v330 = vld [vmem:[#allocation2 + $0x150] sm:$0xff]
    %v331 = vld [vmem:[#allocation2 + $0x158] sm:$0xff]
    %v332 = vld [vmem:[#allocation2 + $0x160] sm:$0xff]
    %v333 = vld [vmem:[#allocation2 + $0x168] sm:$0xff]
    %v334 = vld [vmem:[#allocation2 + $0x170] sm:$0xff]
    %v335 = vld [vmem:[#allocation2 + $0x178] sm:$0xff]
    %v336 = vld [vmem:[#allocation2 + $0x180] sm:$0xff]
    %v337 = vld [vmem:[#allocation2 + $0x188] sm:$0xff]
    %v338 = vld [vmem:[#allocation2 + $0x190] sm:$0xff]
    %v339 = vld [vmem:[#allocation2 + $0x198] sm:$0xff]
    %v340 = vld [vmem:[#allocation2 + $0x1a0] sm:$0xff]
    %v341 = vld [vmem:[#allocation2 + $0x1a8] sm:$0xff]
    %v342 = vld [vmem:[#allocation2 + $0x1b0] sm:$0xff]
    %v343 = vld [vmem:[#allocation2 + $0x1b8] sm:$0xff]
    %v344 = vld [vmem:[#allocation2 + $0x1c0] sm:$0xff]
    %v345 = vld [vmem:[#allocation2 + $0x1c8] sm:$0xff]
    %v346 = vld [vmem:[#allocation2 + $0x1d0] sm:$0xff]
    %v347 = vld [vmem:[#allocation2 + $0x1d8] sm:$0xff]
    %v348 = vld [vmem:[#allocation2 + $0x1e0] sm:$0xff]
    %v349 = vld [vmem:[#allocation2 + $0x1e8] sm:$0xff]
    %v350 = vld [vmem:[#allocation2 + $0x1f0] sm:$0xff]
    %v351 = vld [vmem:[#allocation2 + $0x1f8] sm:$0xff]
    %352 = vmatprep.subr.mxu0 %v289
    %353 = vmatpush1.msra.mxu0 %v288
    %354 = vmatprep.subr.mxu0 %v293
    %355 = vmatpush1.msra.mxu0 %v292
    %356 = vmatprep.subr.mxu0 %v297
    %357 = vmatpush1.msra.mxu0 %v296
    %358 = vmatprep.subr.mxu0 %v301
    %359 = vmatpush1.msra.mxu0 %v300
    %360 = vmatprep.subr.mxu0 %v305
    %361 = vmatpush1.msra.mxu0 %v304
    %362 = vmatprep.subr.mxu0 %v309
    %363 = vmatpush1.msra.mxu0 %v308
    %364 = vmatprep.subr.mxu0 %v313
    %365 = vmatpush1.msra.mxu0 %v312
    %366 = vmatprep.subr.mxu0 %v317
    %367 = vmatpush1.msra.mxu0 %v316
    %368 = vmatprep.subr.mxu0 %v321
    %369 = vmatpush1.msra.mxu0 %v320
    %370 = vmatprep.subr.mxu0 %v325
    %371 = vmatpush1.msra.mxu0 %v324
    %372 = vmatprep.subr.mxu0 %v329
    %373 = vmatpush1.msra.mxu0 %v328
    %374 = vmatprep.subr.mxu0 %v333
    %375 = vmatpush1.msra.mxu0 %v332
    %376 = vmatprep.subr.mxu0 %v337
    %377 = vmatpush1.msra.mxu0 %v336
    %378 = vmatprep.subr.mxu0 %v341
    %379 = vmatpush1.msra.mxu0 %v340
    %380 = vmatprep.subr.mxu0 %v345
    %381 = vmatpush1.msra.mxu0 %v344
    %382 = vmatprep.subr.mxu0 %v349
    %383 = vmatpush1.msra.mxu0 %v348
    %384 = vmatprep.subr.mxu0 0.0
    %385 = vmatpush1.msra.mxu0 0.0
    %386 = vmatprep.subr.mxu0 0.0
    %387 = vmatpush1.msra.mxu0 0.0
    %388 = vmatprep.subr.mxu0 0.0
    %389 = vmatpush1.msra.mxu0 0.0
    %390 = vmatprep.subr.mxu0 0.0
    %391 = vmatpush1.msra.mxu0 0.0
    %392 = vmatprep.subr.mxu0 0.0
    %393 = vmatpush1.msra.mxu0 0.0
    %394 = vmatprep.subr.mxu0 0.0
    %395 = vmatpush1.msra.mxu0 0.0
    %396 = vmatprep.subr.mxu0 0.0
    %397 = vmatpush1.msra.mxu0 0.0
    %398 = vmatprep.subr.mxu0 0.0
    %399 = vmatpush1.msra.mxu0 0.0
    %400 = vmatprep.subr.mxu0 0.0
    %401 = vmatpush1.msra.mxu0 0.0
    %402 = vmatprep.subr.mxu0 0.0
    %403 = vmatpush1.msra.mxu0 0.0
    %404 = vmatprep.subr.mxu0 0.0
    %405 = vmatpush1.msra.mxu0 0.0
    %406 = vmatprep.subr.mxu0 0.0
    %407 = vmatpush1.msra.mxu0 0.0
    %408 = vmatprep.subr.mxu0 0.0
    %409 = vmatpush1.msra.mxu0 0.0
    %410 = vmatprep.subr.mxu0 0.0
    %411 = vmatpush1.msra.mxu0 0.0
    %412 = vmatprep.subr.mxu0 0.0
    %413 = vmatpush1.msra.mxu0 0.0
    %414 = vmatprep.subr.mxu0 0.0
    %415 = vmatpush1.msra.mxu0 0.0
    %416 = vmatprep.mubr.f32.mxu0 0.0
    %417 = vmatmul.mubr.f32.gmra.mrb[0].mxu0 %v287
    %v418 = vpop.f32.mrb[0].mxu0
    %v419 = vadd.f32 0.0, %v418
    %v420 = vpop.f32.mrb[0].mxu0
    %v421 = vadd.f32 0.0, %v420
    %422 = vdwg.mxu0
    %423 = vmatprep.subr.mxu0 %v291
    %424 = vmatpush1.msra.mxu0 %v290
    %425 = vmatprep.subr.mxu0 %v295
    %426 = vmatpush1.msra.mxu0 %v294
    %427 = vmatprep.subr.mxu0 %v299
    %428 = vmatpush1.msra.mxu0 %v298
    %429 = vmatprep.subr.mxu0 %v303
    %430 = vmatpush1.msra.mxu0 %v302
    %431 = vmatprep.subr.mxu0 %v307
    %432 = vmatpush1.msra.mxu0 %v306
    %433 = vmatprep.subr.mxu0 %v311
    %434 = vmatpush1.msra.mxu0 %v310
    %435 = vmatprep.subr.mxu0 %v315
    %436 = vmatpush1.msra.mxu0 %v314
    %437 = vmatprep.subr.mxu0 %v319
    %438 = vmatpush1.msra.mxu0 %v318
    %439 = vmatprep.subr.mxu0 %v323
    %440 = vmatpush1.msra.mxu0 %v322
    %441 = vmatprep.subr.mxu0 %v327
    %442 = vmatpush1.msra.mxu0 %v326
    %443 = vmatprep.subr.mxu0 %v331
    %444 = vmatpush1.msra.mxu0 %v330
    %445 = vmatprep.subr.mxu0 %v335
    %446 = vmatpush1.msra.mxu0 %v334
    %447 = vmatprep.subr.mxu0 %v339
    %448 = vmatpush1.msra.mxu0 %v338
    %449 = vmatprep.subr.mxu0 %v343
    %450 = vmatpush1.msra.mxu0 %v342
    %451 = vmatprep.subr.mxu0 %v347
    %452 = vmatpush1.msra.mxu0 %v346
    %453 = vmatprep.subr.mxu0 %v351
    %454 = vmatpush1.msra.mxu0 %v350
    %455 = vmatprep.subr.mxu0 0.0
    %456 = vmatpush1.msra.mxu0 0.0
    %457 = vmatprep.subr.mxu0 0.0
    %458 = vmatpush1.msra.mxu0 0.0
    %459 = vmatprep.subr.mxu0 0.0
    %460 = vmatpush1.msra.mxu0 0.0
    %461 = vmatprep.subr.mxu0 0.0
    %462 = vmatpush1.msra.mxu0 0.0
    %463 = vmatprep.subr.mxu0 0.0
    %464 = vmatpush1.msra.mxu0 0.0
    %465 = vmatprep.subr.mxu0 0.0
    %466 = vmatpush1.msra.mxu0 0.0
    %467 = vmatprep.subr.mxu0 0.0
    %468 = vmatpush1.msra.mxu0 0.0
    %469 = vmatprep.subr.mxu0 0.0
    %470 = vmatpush1.msra.mxu0 0.0
    %471 = vmatprep.subr.mxu0 0.0
    %472 = vmatpush1.msra.mxu0 0.0
    %473 = vmatprep.subr.mxu0 0.0
    %474 = vmatpush1.msra.mxu0 0.0
    %475 = vmatprep.subr.mxu0 0.0
    %476 = vmatpush1.msra.mxu0 0.0
    %477 = vmatprep.subr.mxu0 0.0
    %478 = vmatpush1.msra.mxu0 0.0
    %479 = vmatprep.subr.mxu0 0.0
    %480 = vmatpush1.msra.mxu0 0.0
    %481 = vmatprep.subr.mxu0 0.0
    %482 = vmatpush1.msra.mxu0 0.0
    %483 = vmatprep.subr.mxu0 0.0
    %484 = vmatpush1.msra.mxu0 0.0
    %485 = vmatprep.subr.mxu0 0.0
    %486 = vmatpush1.msra.mxu0 0.0
    %487 = vmatprep.mubr.f32.mxu0 0.0
    %488 = vmatmul.mubr.f32.gmra.mrb[0].mxu0 %v287
    %v489 = vpop.f32.mrb[0].mxu0
    %v490 = vadd.f32 0.0, %v489
    %v491 = vpop.f32.mrb[0].mxu0
    %v492 = vadd.f32 0.0, %v491
    %493 = vdwg.mxu0
    %v494 = vadd.f32 %v283, %v419
    %v495 = vadd.f32 %v284, %v421
    %v496 = vadd.f32 %v285, %v490
    %v497 = vadd.f32 %v286, %v492
    %v498 = vmul.f32 %v494, 0.5
    %v499 = vtanh.pop %v498
    %v500 = vmul.f32 %v499, 0.5
    %v501 = vadd.f32 %v500, 0.5
    %v502 = vmul.f32 %v495, 0.5
    %v503 = vtanh.pop %v502
    %v504 = vmul.f32 %v503, 0.5
    %v505 = vadd.f32 %v504, 0.5
    %v506 = vtanh.pop %v496
    %v507 = vmul.f32 %v497, 0.5
    %v508 = vtanh.pop %v507
    %v509 = vmul.f32 %v508, 0.5
    %v510 = vadd.f32 %v509, 0.5
    %v511 = vld [vmem:[#allocation4] sm:$0xff]
    %v512 = vmul.f32 %v505, %v511
    %v513 = vmul.f32 %v501, %v506
    %v514 = vadd.f32 %v512, %v513
    %v515 = vtanh.pop %v514
    %v516 = vmul.f32 %v510, %v515
    %517 = vst [vmem:[#allocation4] sm:$0xff] %v514
    %518 = vst [vmem:[#allocation3] sm:$0xff] %v516
    %s519 = scalar_lea.vmem [#allocation8], 8
    %520 = vst [vmem:[%s519] sm:$0xff] %v516
    %s521 = scalar_lea.vmem [#allocation5], 64
    %v522 = vld [vmem:[%s521] sm:$0xff]
    %v523 = vld [vmem:[%s521 + $0x8] sm:$0xff]
    %v524 = vld [vmem:[%s521 + $0x10] sm:$0xff]
    %v525 = vld [vmem:[%s521 + $0x18] sm:$0xff]
    %v526 = vld [vmem:[#allocation3] sm:$0xff]
    %v527 = vld [vmem:[#allocation2] sm:$0xff]
    %v528 = vld [vmem:[#allocation2 + $0x8] sm:$0xff]
    %v529 = vld [vmem:[#allocation2 + $0x10] sm:$0xff]
    %v530 = vld [vmem:[#allocation2 + $0x18] sm:$0xff]
    %v531 = vld [vmem:[#allocation2 + $0x20] sm:$0xff]
    %v532 = vld [vmem:[#allocation2 + $0x28] sm:$0xff]
    %v533 = vld [vmem:[#allocation2 + $0x30] sm:$0xff]
    %v534 = vld [vmem:[#allocation2 + $0x38] sm:$0xff]
    %v535 = vld [vmem:[#allocation2 + $0x40] sm:$0xff]
    %v536 = vld [vmem:[#allocation2 + $0x48] sm:$0xff]
    %v537 = vld [vmem:[#allocation2 + $0x50] sm:$0xff]
    %v538 = vld [vmem:[#allocation2 + $0x58] sm:$0xff]
    %v539 = vld [vmem:[#allocation2 + $0x60] sm:$0xff]
    %v540 = vld [vmem:[#allocation2 + $0x68] sm:$0xff]
    %v541 = vld [vmem:[#allocation2 + $0x70] sm:$0xff]
    %v542 = vld [vmem:[#allocation2 + $0x78] sm:$0xff]
    %v543 = vld [vmem:[#allocation2 + $0x80] sm:$0xff]
    %v544 = vld [vmem:[#allocation2 + $0x88] sm:$0xff]
    %v545 = vld [vmem:[#allocation2 + $0x90] sm:$0xff]
    %v546 = vld [vmem:[#allocation2 + $0x98] sm:$0xff]
    %v547 = vld [vmem:[#allocation2 + $0xa0] sm:$0xff]
    %v548 = vld [vmem:[#allocation2 + $0xa8] sm:$0xff]
    %v549 = vld [vmem:[#allocation2 + $0xb0] sm:$0xff]
    %v550 = vld [vmem:[#allocation2 + $0xb8] sm:$0xff]
    %v551 = vld [vmem:[#allocation2 + $0xc0] sm:$0xff]
    %v552 = vld [vmem:[#allocation2 + $0xc8] sm:$0xff]
    %v553 = vld [vmem:[#allocation2 + $0xd0] sm:$0xff]
    %v554 = vld [vmem:[#allocation2 + $0xd8] sm:$0xff]
    %v555 = vld [vmem:[#allocation2 + $0xe0] sm:$0xff]
    %v556 = vld [vmem:[#allocation2 + $0xe8] sm:$0xff]
    %v557 = vld [vmem:[#allocation2 + $0xf0] sm:$0xff]
    %v558 = vld [vmem:[#allocation2 + $0xf8] sm:$0xff]
    %v559 = vld [vmem:[#allocation2 + $0x100] sm:$0xff]
    %v560 = vld [vmem:[#allocation2 + $0x108] sm:$0xff]
    %v561 = vld [vmem:[#allocation2 + $0x110] sm:$0xff]
    %v562 = vld [vmem:[#allocation2 + $0x118] sm:$0xff]
    %v563 = vld [vmem:[#allocation2 + $0x120] sm:$0xff]
    %v564 = vld [vmem:[#allocation2 + $0x128] sm:$0xff]
    %v565 = vld [vmem:[#allocation2 + $0x130] sm:$0xff]
    %v566 = vld [vmem:[#allocation2 + $0x138] sm:$0xff]
    %v567 = vld [vmem:[#allocation2 + $0x140] sm:$0xff]
    %v568 = vld [vmem:[#allocation2 + $0x148] sm:$0xff]
    %v569 = vld [vmem:[#allocation2 + $0x150] sm:$0xff]
    %v570 = vld [vmem:[#allocation2 + $0x158] sm:$0xff]
    %v571 = vld [vmem:[#allocation2 + $0x160] sm:$0xff]
    %v572 = vld [vmem:[#allocation2 + $0x168] sm:$0xff]
    %v573 = vld [vmem:[#allocation2 + $0x170] sm:$0xff]
    %v574 = vld [vmem:[#allocation2 + $0x178] sm:$0xff]
    %v575 = vld [vmem:[#allocation2 + $0x180] sm:$0xff]
    %v576 = vld [vmem:[#allocation2 + $0x188] sm:$0xff]
    %v577 = vld [vmem:[#allocation2 + $0x190] sm:$0xff]
    %v578 = vld [vmem:[#allocation2 + $0x198] sm:$0xff]
    %v579 = vld [vmem:[#allocation2 + $0x1a0] sm:$0xff]
    %v580 = vld [vmem:[#allocation2 + $0x1a8] sm:$0xff]
    %v581 = vld [vmem:[#allocation2 + $0x1b0] sm:$0xff]
    %v582 = vld [vmem:[#allocation2 + $0x1b8] sm:$0xff]
    %v583 = vld [vmem:[#allocation2 + $0x1c0] sm:$0xff]
    %v584 = vld [vmem:[#allocation2 + $0x1c8] sm:$0xff]
    %v585 = vld [vmem:[#allocation2 + $0x1d0] sm:$0xff]
    %v586 = vld [vmem:[#allocation2 + $0x1d8] sm:$0xff]
    %v587 = vld [vmem:[#allocation2 + $0x1e0] sm:$0xff]
    %v588 = vld [vmem:[#allocation2 + $0x1e8] sm:$0xff]
    %v589 = vld [vmem:[#allocation2 + $0x1f0] sm:$0xff]
    %v590 = vld [vmem:[#allocation2 + $0x1f8] sm:$0xff]
    %591 = vmatprep.subr.mxu0 %v528
    %592 = vmatpush1.msra.mxu0 %v527
    %593 = vmatprep.subr.mxu0 %v532
    %594 = vmatpush1.msra.mxu0 %v531
    %595 = vmatprep.subr.mxu0 %v536
    %596 = vmatpush1.msra.mxu0 %v535
    %597 = vmatprep.subr.mxu0 %v540
    %598 = vmatpush1.msra.mxu0 %v539
    %599 = vmatprep.subr.mxu0 %v544
    %600 = vmatpush1.msra.mxu0 %v543
    %601 = vmatprep.subr.mxu0 %v548
    %602 = vmatpush1.msra.mxu0 %v547
    %603 = vmatprep.subr.mxu0 %v552
    %604 = vmatpush1.msra.mxu0 %v551
    %605 = vmatprep.subr.mxu0 %v556
    %606 = vmatpush1.msra.mxu0 %v555
    %607 = vmatprep.subr.mxu0 %v560
    %608 = vmatpush1.msra.mxu0 %v559
    %609 = vmatprep.subr.mxu0 %v564
    %610 = vmatpush1.msra.mxu0 %v563
    %611 = vmatprep.subr.mxu0 %v568
    %612 = vmatpush1.msra.mxu0 %v567
    %613 = vmatprep.subr.mxu0 %v572
    %614 = vmatpush1.msra.mxu0 %v571
    %615 = vmatprep.subr.mxu0 %v576
    %616 = vmatpush1.msra.mxu0 %v575
    %617 = vmatprep.subr.mxu0 %v580
    %618 = vmatpush1.msra.mxu0 %v579
    %619 = vmatprep.subr.mxu0 %v584
    %620 = vmatpush1.msra.mxu0 %v583
    %621 = vmatprep.subr.mxu0 %v588
    %622 = vmatpush1.msra.mxu0 %v587
    %623 = vmatprep.subr.mxu0 0.0
    %624 = vmatpush1.msra.mxu0 0.0
    %625 = vmatprep.subr.mxu0 0.0
    %626 = vmatpush1.msra.mxu0 0.0
    %627 = vmatprep.subr.mxu0 0.0
    %628 = vmatpush1.msra.mxu0 0.0
    %629 = vmatprep.subr.mxu0 0.0
    %630 = vmatpush1.msra.mxu0 0.0
    %631 = vmatprep.subr.mxu0 0.0
    %632 = vmatpush1.msra.mxu0 0.0
    %633 = vmatprep.subr.mxu0 0.0
    %634 = vmatpush1.msra.mxu0 0.0
    %635 = vmatprep.subr.mxu0 0.0
    %636 = vmatpush1.msra.mxu0 0.0
    %637 = vmatprep.subr.mxu0 0.0
    %638 = vmatpush1.msra.mxu0 0.0
    %639 = vmatprep.subr.mxu0 0.0
    %640 = vmatpush1.msra.mxu0 0.0
    %641 = vmatprep.subr.mxu0 0.0
    %642 = vmatpush1.msra.mxu0 0.0
    %643 = vmatprep.subr.mxu0 0.0
    %644 = vmatpush1.msra.mxu0 0.0
    %645 = vmatprep.subr.mxu0 0.0
    %646 = vmatpush1.msra.mxu0 0.0
    %647 = vmatprep.subr.mxu0 0.0
    %648 = vmatpush1.msra.mxu0 0.0
    %649 = vmatprep.subr.mxu0 0.0
    %650 = vmatpush1.msra.mxu0 0.0
    %651 = vmatprep.subr.mxu0 0.0
    %652 = vmatpush1.msra.mxu0 0.0
    %653 = vmatprep.subr.mxu0 0.0
    %654 = vmatpush1.msra.mxu0 0.0
    %655 = vmatprep.mubr.f32.mxu0 0.0
    %656 = vmatmul.mubr.f32.gmra.mrb[0].mxu0 %v526
    %v657 = vpop.f32.mrb[0].mxu0
    %v658 = vadd.f32 0.0, %v657
    %v659 = vpop.f32.mrb[0].mxu0
    %v660 = vadd.f32 0.0, %v659
    %661 = vdwg.mxu0
    %662 = vmatprep.subr.mxu0 %v530
    %663 = vmatpush1.msra.mxu0 %v529
    %664 = vmatprep.subr.mxu0 %v534
    %665 = vmatpush1.msra.mxu0 %v533
    %666 = vmatprep.subr.mxu0 %v538
    %667 = vmatpush1.msra.mxu0 %v537
    %668 = vmatprep.subr.mxu0 %v542
    %669 = vmatpush1.msra.mxu0 %v541
    %670 = vmatprep.subr.mxu0 %v546
    %671 = vmatpush1.msra.mxu0 %v545
    %672 = vmatprep.subr.mxu0 %v550
    %673 = vmatpush1.msra.mxu0 %v549
    %674 = vmatprep.subr.mxu0 %v554
    %675 = vmatpush1.msra.mxu0 %v553
    %676 = vmatprep.subr.mxu0 %v558
    %677 = vmatpush1.msra.mxu0 %v557
    %678 = vmatprep.subr.mxu0 %v562
    %679 = vmatpush1.msra.mxu0 %v561
    %680 = vmatprep.subr.mxu0 %v566
    %681 = vmatpush1.msra.mxu0 %v565
    %682 = vmatprep.subr.mxu0 %v570
    %683 = vmatpush1.msra.mxu0 %v569
    %684 = vmatprep.subr.mxu0 %v574
    %685 = vmatpush1.msra.mxu0 %v573
    %686 = vmatprep.subr.mxu0 %v578
    %687 = vmatpush1.msra.mxu0 %v577
    %688 = vmatprep.subr.mxu0 %v582
    %689 = vmatpush1.msra.mxu0 %v581
    %690 = vmatprep.subr.mxu0 %v586
    %691 = vmatpush1.msra.mxu0 %v585
    %692 = vmatprep.subr.mxu0 %v590
    %693 = vmatpush1.msra.mxu0 %v589
    %694 = vmatprep.subr.mxu0 0.0
    %695 = vmatpush1.msra.mxu0 0.0
    %696 = vmatprep.subr.mxu0 0.0
    %697 = vmatpush1.msra.mxu0 0.0
    %698 = vmatprep.subr.mxu0 0.0
    %699 = vmatpush1.msra.mxu0 0.0
    %700 = vmatprep.subr.mxu0 0.0
    %701 = vmatpush1.msra.mxu0 0.0
    %702 = vmatprep.subr.mxu0 0.0
    %703 = vmatpush1.msra.mxu0 0.0
    %704 = vmatprep.subr.mxu0 0.0
    %705 = vmatpush1.msra.mxu0 0.0
    %706 = vmatprep.subr.mxu0 0.0
    %707 = vmatpush1.msra.mxu0 0.0
    %708 = vmatprep.subr.mxu0 0.0
    %709 = vmatpush1.msra.mxu0 0.0
    %710 = vmatprep.subr.mxu0 0.0
    %711 = vmatpush1.msra.mxu0 0.0
    %712 = vmatprep.subr.mxu0 0.0
    %713 = vmatpush1.msra.mxu0 0.0
    %714 = vmatprep.subr.mxu0 0.0
    %715 = vmatpush1.msra.mxu0 0.0
    %716 = vmatprep.subr.mxu0 0.0
    %717 = vmatpush1.msra.mxu0 0.0
    %718 = vmatprep.subr.mxu0 0.0
    %719 = vmatpush1.msra.mxu0 0.0
    %720 = vmatprep.subr.mxu0 0.0
    %721 = vmatpush1.msra.mxu0 0.0
    %722 = vmatprep.subr.mxu0 0.0
    %723 = vmatpush1.msra.mxu0 0.0
    %724 = vmatprep.subr.mxu0 0.0
    %725 = vmatpush1.msra.mxu0 0.0
    %726 = vmatprep.mubr.f32.mxu0 0.0
    %727 = vmatmul.mubr.f32.gmra.mrb[0].mxu0 %v526
    %v728 = vpop.f32.mrb[0].mxu0
    %v729 = vadd.f32 0.0, %v728
    %v730 = vpop.f32.mrb[0].mxu0
    %v731 = vadd.f32 0.0, %v730
    %732 = vdwg.mxu0
    %v733 = vadd.f32 %v522, %v658
    %v734 = vadd.f32 %v523, %v660
    %v735 = vadd.f32 %v524, %v729
    %v736 = vadd.f32 %v525, %v731
    %v737 = vmul.f32 %v733, 0.5
    %v738 = vtanh.pop %v737
    %v739 = vmul.f32 %v738, 0.5
    %v740 = vadd.f32 %v739, 0.5
    %v741 = vmul.f32 %v734, 0.5
    %v742 = vtanh.pop %v741
    %v743 = vmul.f32 %v742, 0.5
    %v744 = vadd.f32 %v743, 0.5
    %v745 = vtanh.pop %v735
    %v746 = vmul.f32 %v736, 0.5
    %v747 = vtanh.pop %v746
    %v748 = vmul.f32 %v747, 0.5
    %v749 = vadd.f32 %v748, 0.5
    %v750 = vld [vmem:[#allocation4] sm:$0xff]
    %v751 = vmul.f32 %v744, %v750
    %v752 = vmul.f32 %v740, %v745
    %v753 = vadd.f32 %v751, %v752
    %v754 = vtanh.pop %v753
    %v755 = vmul.f32 %v749, %v754
    %756 = vst [vmem:[#allocation4] sm:$0xff] %v753
    %757 = vst [vmem:[#allocation3] sm:$0xff] %v755
    %s758 = scalar_lea.vmem [#allocation8], 16
    %759 = vst [vmem:[%s758] sm:$0xff] %v755
    %s760 = scalar_lea.vmem [#allocation5], 96
    %v761 = vld [vmem:[%s760] sm:$0xff]
    %v762 = vld [vmem:[%s760 + $0x8] sm:$0xff]
    %v763 = vld [vmem:[%s760 + $0x10] sm:$0xff]
    %v764 = vld [vmem:[%s760 + $0x18] sm:$0xff]
    %v765 = vld [vmem:[#allocation3] sm:$0xff]
    %v766 = vld [vmem:[#allocation2] sm:$0xff]
    %v767 = vld [vmem:[#allocation2 + $0x8] sm:$0xff]
    %v768 = vld [vmem:[#allocation2 + $0x10] sm:$0xff]
    %v769 = vld [vmem:[#allocation2 + $0x18] sm:$0xff]
    %v770 = vld [vmem:[#allocation2 + $0x20] sm:$0xff]
    %v771 = vld [vmem:[#allocation2 + $0x28] sm:$0xff]
    %v772 = vld [vmem:[#allocation2 + $0x30] sm:$0xff]
    %v773 = vld [vmem:[#allocation2 + $0x38] sm:$0xff]
    %v774 = vld [vmem:[#allocation2 + $0x40] sm:$0xff]
    %v775 = vld [vmem:[#allocation2 + $0x48] sm:$0xff]
    %v776 = vld [vmem:[#allocation2 + $0x50] sm:$0xff]
    %v777 = vld [vmem:[#allocation2 + $0x58] sm:$0xff]
    %v778 = vld [vmem:[#allocation2 + $0x60] sm:$0xff]
    %v779 = vld [vmem:[#allocation2 + $0x68] sm:$0xff]
    %v780 = vld [vmem:[#allocation2 + $0x70] sm:$0xff]
    %v781 = vld [vmem:[#allocation2 + $0x78] sm:$0xff]
    %v782 = vld [vmem:[#allocation2 + $0x80] sm:$0xff]
    %v783 = vld [vmem:[#allocation2 + $0x88] sm:$0xff]
    %v784 = vld [vmem:[#allocation2 + $0x90] sm:$0xff]
    %v785 = vld [vmem:[#allocation2 + $0x98] sm:$0xff]
    %v786 = vld [vmem:[#allocation2 + $0xa0] sm:$0xff]
    %v787 = vld [vmem:[#allocation2 + $0xa8] sm:$0xff]
    %v788 = vld [vmem:[#allocation2 + $0xb0] sm:$0xff]
    %v789 = vld [vmem:[#allocation2 + $0xb8] sm:$0xff]
    %v790 = vld [vmem:[#allocation2 + $0xc0] sm:$0xff]
    %v791 = vld [vmem:[#allocation2 + $0xc8] sm:$0xff]
    %v792 = vld [vmem:[#allocation2 + $0xd0] sm:$0xff]
    %v793 = vld [vmem:[#allocation2 + $0xd8] sm:$0xff]
    %v794 = vld [vmem:[#allocation2 + $0xe0] sm:$0xff]
    %v795 = vld [vmem:[#allocation2 + $0xe8] sm:$0xff]
    %v796 = vld [vmem:[#allocation2 + $0xf0] sm:$0xff]
    %v797 = vld [vmem:[#allocation2 + $0xf8] sm:$0xff]
    %v798 = vld [vmem:[#allocation2 + $0x100] sm:$0xff]
    %v799 = vld [vmem:[#allocation2 + $0x108] sm:$0xff]
    %v800 = vld [vmem:[#allocation2 + $0x110] sm:$0xff]
    %v801 = vld [vmem:[#allocation2 + $0x118] sm:$0xff]
    %v802 = vld [vmem:[#allocation2 + $0x120] sm:$0xff]
    %v803 = vld [vmem:[#allocation2 + $0x128] sm:$0xff]
    %v804 = vld [vmem:[#allocation2 + $0x130] sm:$0xff]
    %v805 = vld [vmem:[#allocation2 + $0x138] sm:$0xff]
    %v806 = vld [vmem:[#allocation2 + $0x140] sm:$0xff]
    %v807 = vld [vmem:[#allocation2 + $0x148] sm:$0xff]
    %v808 = vld [vmem:[#allocation2 + $0x150] sm:$0xff]
    %v809 = vld [vmem:[#allocation2 + $0x158] sm:$0xff]
    %v810 = vld [vmem:[#allocation2 + $0x160] sm:$0xff]
    %v811 = vld [vmem:[#allocation2 + $0x168] sm:$0xff]
    %v812 = vld [vmem:[#allocation2 + $0x170] sm:$0xff]
    %v813 = vld [vmem:[#allocation2 + $0x178] sm:$0xff]
    %v814 = vld [vmem:[#allocation2 + $0x180] sm:$0xff]
    %v815 = vld [vmem:[#allocation2 + $0x188] sm:$0xff]
    %v816 = vld [vmem:[#allocation2 + $0x190] sm:$0xff]
    %v817 = vld [vmem:[#allocation2 + $0x198] sm:$0xff]
    %v818 = vld [vmem:[#allocation2 + $0x1a0] sm:$0xff]
    %v819 = vld [vmem:[#allocation2 + $0x1a8] sm:$0xff]
    %v820 = vld [vmem:[#allocation2 + $0x1b0] sm:$0xff]
    %v821 = vld [vmem:[#allocation2 + $0x1b8] sm:$0xff]
    %v822 = vld [vmem:[#allocation2 + $0x1c0] sm:$0xff]
    %v823 = vld [vmem:[#allocation2 + $0x1c8] sm:$0xff]
    %v824 = vld [vmem:[#allocation2 + $0x1d0] sm:$0xff]
    %v825 = vld [vmem:[#allocation2 + $0x1d8] sm:$0xff]
    %v826 = vld [vmem:[#allocation2 + $0x1e0] sm:$0xff]
    %v827 = vld [vmem:[#allocation2 + $0x1e8] sm:$0xff]
    %v828 = vld [vmem:[#allocation2 + $0x1f0] sm:$0xff]
    %v829 = vld [vmem:[#allocation2 + $0x1f8] sm:$0xff]
    %830 = vmatprep.subr.mxu0 %v767
    %831 = vmatpush1.msra.mxu0 %v766
    %832 = vmatprep.subr.mxu0 %v771
    %833 = vmatpush1.msra.mxu0 %v770
    %834 = vmatprep.subr.mxu0 %v775
    %835 = vmatpush1.msra.mxu0 %v774
    %836 = vmatprep.subr.mxu0 %v779
    %837 = vmatpush1.msra.mxu0 %v778
    %838 = vmatprep.subr.mxu0 %v783
    %839 = vmatpush1.msra.mxu0 %v782
    %840 = vmatprep.subr.mxu0 %v787
    %841 = vmatpush1.msra.mxu0 %v786
    %842 = vmatprep.subr.mxu0 %v791
    %843 = vmatpush1.msra.mxu0 %v790
    %844 = vmatprep.subr.mxu0 %v795
    %845 = vmatpush1.msra.mxu0 %v794
    %846 = vmatprep.subr.mxu0 %v799
    %847 = vmatpush1.msra.mxu0 %v798
    %848 = vmatprep.subr.mxu0 %v803
    %849 = vmatpush1.msra.mxu0 %v802
    %850 = vmatprep.subr.mxu0 %v807
    %851 = vmatpush1.msra.mxu0 %v806
    %852 = vmatprep.subr.mxu0 %v811
    %853 = vmatpush1.msra.mxu0 %v810
    %854 = vmatprep.subr.mxu0 %v815
    %855 = vmatpush1.msra.mxu0 %v814
    %856 = vmatprep.subr.mxu0 %v819
    %857 = vmatpush1.msra.mxu0 %v818
    %858 = vmatprep.subr.mxu0 %v823
    %859 = vmatpush1.msra.mxu0 %v822
    %860 = vmatprep.subr.mxu0 %v827
    %861 = vmatpush1.msra.mxu0 %v826
    %862 = vmatprep.subr.mxu0 0.0
    %863 = vmatpush1.msra.mxu0 0.0
    %864 = vmatprep.subr.mxu0 0.0
    %865 = vmatpush1.msra.mxu0 0.0
    %866 = vmatprep.subr.mxu0 0.0
    %867 = vmatpush1.msra.mxu0 0.0
    %868 = vmatprep.subr.mxu0 0.0
    %869 = vmatpush1.msra.mxu0 0.0
    %870 = vmatprep.subr.mxu0 0.0
    %871 = vmatpush1.msra.mxu0 0.0
    %872 = vmatprep.subr.mxu0 0.0
    %873 = vmatpush1.msra.mxu0 0.0
    %874 = vmatprep.subr.mxu0 0.0
    %875 = vmatpush1.msra.mxu0 0.0
    %876 = vmatprep.subr.mxu0 0.0
    %877 = vmatpush1.msra.mxu0 0.0
    %878 = vmatprep.subr.mxu0 0.0
    %879 = vmatpush1.msra.mxu0 0.0
    %880 = vmatprep.subr.mxu0 0.0
    %881 = vmatpush1.msra.mxu0 0.0
    %882 = vmatprep.subr.mxu0 0.0
    %883 = vmatpush1.msra.mxu0 0.0
    %884 = vmatprep.subr.mxu0 0.0
    %885 = vmatpush1.msra.mxu0 0.0
    %886 = vmatprep.subr.mxu0 0.0
    %887 = vmatpush1.msra.mxu0 0.0
    %888 = vmatprep.subr.mxu0 0.0
    %889 = vmatpush1.msra.mxu0 0.0
    %890 = vmatprep.subr.mxu0 0.0
    %891 = vmatpush1.msra.mxu0 0.0
    %892 = vmatprep.subr.mxu0 0.0
    %893 = vmatpush1.msra.mxu0 0.0
    %894 = vmatprep.mubr.f32.mxu0 0.0
    %895 = vmatmul.mubr.f32.gmra.mrb[0].mxu0 %v765
    %v896 = vpop.f32.mrb[0].mxu0
    %v897 = vadd.f32 0.0, %v896
    %v898 = vpop.f32.mrb[0].mxu0
    %v899 = vadd.f32 0.0, %v898
    %900 = vdwg.mxu0
    %901 = vmatprep.subr.mxu0 %v769
    %902 = vmatpush1.msra.mxu0 %v768
    %903 = vmatprep.subr.mxu0 %v773
    %904 = vmatpush1.msra.mxu0 %v772
    %905 = vmatprep.subr.mxu0 %v777
    %906 = vmatpush1.msra.mxu0 %v776
    %907 = vmatprep.subr.mxu0 %v781
    %908 = vmatpush1.msra.mxu0 %v780
    %909 = vmatprep.subr.mxu0 %v785
    %910 = vmatpush1.msra.mxu0 %v784
    %911 = vmatprep.subr.mxu0 %v789
    %912 = vmatpush1.msra.mxu0 %v788
    %913 = vmatprep.subr.mxu0 %v793
    %914 = vmatpush1.msra.mxu0 %v792
    %915 = vmatprep.subr.mxu0 %v797
    %916 = vmatpush1.msra.mxu0 %v796
    %917 = vmatprep.subr.mxu0 %v801
    %918 = vmatpush1.msra.mxu0 %v800
    %919 = vmatprep.subr.mxu0 %v805
    %920 = vmatpush1.msra.mxu0 %v804
    %921 = vmatprep.subr.mxu0 %v809
    %922 = vmatpush1.msra.mxu0 %v808
    %923 = vmatprep.subr.mxu0 %v813
    %924 = vmatpush1.msra.mxu0 %v812
    %925 = vmatprep.subr.mxu0 %v817
    %926 = vmatpush1.msra.mxu0 %v816
    %927 = vmatprep.subr.mxu0 %v821
    %928 = vmatpush1.msra.mxu0 %v820
    %929 = vmatprep.subr.mxu0 %v825
    %930 = vmatpush1.msra.mxu0 %v824
    %931 = vmatprep.subr.mxu0 %v829
    %932 = vmatpush1.msra.mxu0 %v828
    %933 = vmatprep.subr.mxu0 0.0
    %934 = vmatpush1.msra.mxu0 0.0
    %935 = vmatprep.subr.mxu0 0.0
    %936 = vmatpush1.msra.mxu0 0.0
    %937 = vmatprep.subr.mxu0 0.0
    %938 = vmatpush1.msra.mxu0 0.0
    %939 = vmatprep.subr.mxu0 0.0
    %940 = vmatpush1.msra.mxu0 0.0
    %941 = vmatprep.subr.mxu0 0.0
    %942 = vmatpush1.msra.mxu0 0.0
    %943 = vmatprep.subr.mxu0 0.0
    %944 = vmatpush1.msra.mxu0 0.0
    %945 = vmatprep.subr.mxu0 0.0
    %946 = vmatpush1.msra.mxu0 0.0
    %947 = vmatprep.subr.mxu0 0.0
    %948 = vmatpush1.msra.mxu0 0.0
    %949 = vmatprep.subr.mxu0 0.0
    %950 = vmatpush1.msra.mxu0 0.0
    %951 = vmatprep.subr.mxu0 0.0
    %952 = vmatpush1.msra.mxu0 0.0
    %953 = vmatprep.subr.mxu0 0.0
    %954 = vmatpush1.msra.mxu0 0.0
    %955 = vmatprep.subr.mxu0 0.0
    %956 = vmatpush1.msra.mxu0 0.0
    %957 = vmatprep.subr.mxu0 0.0
    %958 = vmatpush1.msra.mxu0 0.0
    %959 = vmatprep.subr.mxu0 0.0
    %960 = vmatpush1.msra.mxu0 0.0
    %961 = vmatprep.subr.mxu0 0.0
    %962 = vmatpush1.msra.mxu0 0.0
    %963 = vmatprep.subr.mxu0 0.0
    %964 = vmatpush1.msra.mxu0 0.0
    %965 = vmatprep.mubr.f32.mxu0 0.0
    %966 = vmatmul.mubr.f32.gmra.mrb[0].mxu0 %v765
    %v967 = vpop.f32.mrb[0].mxu0
    %v968 = vadd.f32 0.0, %v967
    %v969 = vpop.f32.mrb[0].mxu0
    %v970 = vadd.f32 0.0, %v969
    %971 = vdwg.mxu0
    %v972 = vadd.f32 %v761, %v897
    %v973 = vadd.f32 %v762, %v899
    %v974 = vadd.f32 %v763, %v968
    %v975 = vadd.f32 %v764, %v970
    %v976 = vmul.f32 %v972, 0.5
    %v977 = vtanh.pop %v976
    %v978 = vmul.f32 %v977, 0.5
    %v979 = vadd.f32 %v978, 0.5
    %v980 = vmul.f32 %v973, 0.5
    %v981 = vtanh.pop %v980
    %v982 = vmul.f32 %v981, 0.5
    %v983 = vadd.f32 %v982, 0.5
    %v984 = vtanh.pop %v974
    %v985 = vmul.f32 %v975, 0.5
    %v986 = vtanh.pop %v985
    %v987 = vmul.f32 %v986, 0.5
    %v988 = vadd.f32 %v987, 0.5
    %v989 = vld [vmem:[#allocation4] sm:$0xff]
    %v990 = vmul.f32 %v983, %v989
    %v991 = vmul.f32 %v979, %v984
    %v992 = vadd.f32 %v990, %v991
    %v993 = vtanh.pop %v992
    %v994 = vmul.f32 %v988, %v993
    %995 = vst [vmem:[#allocation4] sm:$0xff] %v992
    %996 = vst [vmem:[#allocation3] sm:$0xff] %v994
    %s997 = scalar_lea.vmem [#allocation8], 24
    %998 = vst [vmem:[%s997] sm:$0xff] %v994
    %s999 = scalar_lea.vmem [#allocation5], 128
    %v1000 = vld [vmem:[%s999] sm:$0xff]
    %v1001 = vld [vmem:[%s999 + $0x8] sm:$0xff]
    %v1002 = vld [vmem:[%s999 + $0x10] sm:$0xff]
    %v1003 = vld [vmem:[%s999 + $0x18] sm:$0xff]
    %v1004 = vld [vmem:[#allocation3] sm:$0xff]
    %v1005 = vld [vmem:[#allocation2] sm:$0xff]
    %v1006 = vld [vmem:[#allocation2 + $0x8] sm:$0xff]
    %v1007 = vld [vmem:[#allocation2 + $0x10] sm:$0xff]
    %v1008 = vld [vmem:[#allocation2 + $0x18] sm:$0xff]
    %v1009 = vld [vmem:[#allocation2 + $0x20] sm:$0xff]
    %v1010 = vld [vmem:[#allocation2 + $0x28] sm:$0xff]
    %v1011 = vld [vmem:[#allocation2 + $0x30] sm:$0xff]
    %v1012 = vld [vmem:[#allocation2 + $0x38] sm:$0xff]
    %v1013 = vld [vmem:[#allocation2 + $0x40] sm:$0xff]
    %v1014 = vld [vmem:[#allocation2 + $0x48] sm:$0xff]
    %v1015 = vld [vmem:[#allocation2 + $0x50] sm:$0xff]
    %v1016 = vld [vmem:[#allocation2 + $0x58] sm:$0xff]
    %v1017 = vld [vmem:[#allocation2 + $0x60] sm:$0xff]
    %v1018 = vld [vmem:[#allocation2 + $0x68] sm:$0xff]
    %v1019 = vld [vmem:[#allocation2 + $0x70] sm:$0xff]
    %v1020 = vld [vmem:[#allocation2 + $0x78] sm:$0xff]
    %v1021 = vld [vmem:[#allocation2 + $0x80] sm:$0xff]
    %v1022 = vld [vmem:[#allocation2 + $0x88] sm:$0xff]
    %v1023 = vld [vmem:[#allocation2 + $0x90] sm:$0xff]
    %v1024 = vld [vmem:[#allocation2 + $0x98] sm:$0xff]
    %v1025 = vld [vmem:[#allocation2 + $0xa0] sm:$0xff]
    %v1026 = vld [vmem:[#allocation2 + $0xa8] sm:$0xff]
    %v1027 = vld [vmem:[#allocation2 + $0xb0] sm:$0xff]
    %v1028 = vld [vmem:[#allocation2 + $0xb8] sm:$0xff]
    %v1029 = vld [vmem:[#allocation2 + $0xc0] sm:$0xff]
    %v1030 = vld [vmem:[#allocation2 + $0xc8] sm:$0xff]
    %v1031 = vld [vmem:[#allocation2 + $0xd0] sm:$0xff]
    %v1032 = vld [vmem:[#allocation2 + $0xd8] sm:$0xff]
    %v1033 = vld [vmem:[#allocation2 + $0xe0] sm:$0xff]
    %v1034 = vld [vmem:[#allocation2 + $0xe8] sm:$0xff]
    %v1035 = vld [vmem:[#allocation2 + $0xf0] sm:$0xff]
    %v1036 = vld [vmem:[#allocation2 + $0xf8] sm:$0xff]
    %v1037 = vld [vmem:[#allocation2 + $0x100] sm:$0xff]
    %v1038 = vld [vmem:[#allocation2 + $0x108] sm:$0xff]
    %v1039 = vld [vmem:[#allocation2 + $0x110] sm:$0xff]
    %v1040 = vld [vmem:[#allocation2 + $0x118] sm:$0xff]
    %v1041 = vld [vmem:[#allocation2 + $0x120] sm:$0xff]
    %v1042 = vld [vmem:[#allocation2 + $0x128] sm:$0xff]
    %v1043 = vld [vmem:[#allocation2 + $0x130] sm:$0xff]
    %v1044 = vld [vmem:[#allocation2 + $0x138] sm:$0xff]
    %v1045 = vld [vmem:[#allocation2 + $0x140] sm:$0xff]
    %v1046 = vld [vmem:[#allocation2 + $0x148] sm:$0xff]
    %v1047 = vld [vmem:[#allocation2 + $0x150] sm:$0xff]
    %v1048 = vld [vmem:[#allocation2 + $0x158] sm:$0xff]
    %v1049 = vld [vmem:[#allocation2 + $0x160] sm:$0xff]
    %v1050 = vld [vmem:[#allocation2 + $0x168] sm:$0xff]
    %v1051 = vld [vmem:[#allocation2 + $0x170] sm:$0xff]
    %v1052 = vld [vmem:[#allocation2 + $0x178] sm:$0xff]
    %v1053 = vld [vmem:[#allocation2 + $0x180] sm:$0xff]
    %v1054 = vld [vmem:[#allocation2 + $0x188] sm:$0xff]
    %v1055 = vld [vmem:[#allocation2 + $0x190] sm:$0xff]
    %v1056 = vld [vmem:[#allocation2 + $0x198] sm:$0xff]
    %v1057 = vld [vmem:[#allocation2 + $0x1a0] sm:$0xff]
    %v1058 = vld [vmem:[#allocation2 + $0x1a8] sm:$0xff]
    %v1059 = vld [vmem:[#allocation2 + $0x1b0] sm:$0xff]
    %v1060 = vld [vmem:[#allocation2 + $0x1b8] sm:$0xff]
    %v1061 = vld [vmem:[#allocation2 + $0x1c0] sm:$0xff]
    %v1062 = vld [vmem:[#allocation2 + $0x1c8] sm:$0xff]
    %v1063 = vld [vmem:[#allocation2 + $0x1d0] sm:$0xff]
    %v1064 = vld [vmem:[#allocation2 + $0x1d8] sm:$0xff]
    %v1065 = vld [vmem:[#allocation2 + $0x1e0] sm:$0xff]
    %v1066 = vld [vmem:[#allocation2 + $0x1e8] sm:$0xff]
    %v1067 = vld [vmem:[#allocation2 + $0x1f0] sm:$0xff]
    %v1068 = vld [vmem:[#allocation2 + $0x1f8] sm:$0xff]
    %1069 = vmatprep.subr.mxu0 %v1006
    %1070 = vmatpush1.msra.mxu0 %v1005
    %1071 = vmatprep.subr.mxu0 %v1010
    %1072 = vmatpush1.msra.mxu0 %v1009
    %1073 = vmatprep.subr.mxu0 %v1014
    %1074 = vmatpush1.msra.mxu0 %v1013
    %1075 = vmatprep.subr.mxu0 %v1018
    %1076 = vmatpush1.msra.mxu0 %v1017
    %1077 = vmatprep.subr.mxu0 %v1022
    %1078 = vmatpush1.msra.mxu0 %v1021
    %1079 = vmatprep.subr.mxu0 %v1026
    %1080 = vmatpush1.msra.mxu0 %v1025
    %1081 = vmatprep.subr.mxu0 %v1030
    %1082 = vmatpush1.msra.mxu0 %v1029
    %1083 = vmatprep.subr.mxu0 %v1034
    %1084 = vmatpush1.msra.mxu0 %v1033
    %1085 = vmatprep.subr.mxu0 %v1038
    %1086 = vmatpush1.msra.mxu0 %v1037
    %1087 = vmatprep.subr.mxu0 %v1042
    %1088 = vmatpush1.msra.mxu0 %v1041
    %1089 = vmatprep.subr.mxu0 %v1046
    %1090 = vmatpush1.msra.mxu0 %v1045
    %1091 = vmatprep.subr.mxu0 %v1050
    %1092 = vmatpush1.msra.mxu0 %v1049
    %1093 = vmatprep.subr.mxu0 %v1054
    %1094 = vmatpush1.msra.mxu0 %v1053
    %1095 = vmatprep.subr.mxu0 %v1058
    %1096 = vmatpush1.msra.mxu0 %v1057
    %1097 = vmatprep.subr.mxu0 %v1062
    %1098 = vmatpush1.msra.mxu0 %v1061
    %1099 = vmatprep.subr.mxu0 %v1066
    %1100 = vmatpush1.msra.mxu0 %v1065
    %1101 = vmatprep.subr.mxu0 0.0
    %1102 = vmatpush1.msra.mxu0 0.0
    %1103 = vmatprep.subr.mxu0 0.0
    %1104 = vmatpush1.msra.mxu0 0.0
    %1105 = vmatprep.subr.mxu0 0.0
    %1106 = vmatpush1.msra.mxu0 0.0
    %1107 = vmatprep.subr.mxu0 0.0
    %1108 = vmatpush1.msra.mxu0 0.0
    %1109 = vmatprep.subr.mxu0 0.0
    %1110 = vmatpush1.msra.mxu0 0.0
    %1111 = vmatprep.subr.mxu0 0.0
    %1112 = vmatpush1.msra.mxu0 0.0
    %1113 = vmatprep.subr.mxu0 0.0
    %1114 = vmatpush1.msra.mxu0 0.0
    %1115 = vmatprep.subr.mxu0 0.0
    %1116 = vmatpush1.msra.mxu0 0.0
    %1117 = vmatprep.subr.mxu0 0.0
    %1118 = vmatpush1.msra.mxu0 0.0
    %1119 = vmatprep.subr.mxu0 0.0
    %1120 = vmatpush1.msra.mxu0 0.0
    %1121 = vmatprep.subr.mxu0 0.0
    %1122 = vmatpush1.msra.mxu0 0.0
    %1123 = vmatprep.subr.mxu0 0.0
    %1124 = vmatpush1.msra.mxu0 0.0
    %1125 = vmatprep.subr.mxu0 0.0
    %1126 = vmatpush1.msra.mxu0 0.0
    %1127 = vmatprep.subr.mxu0 0.0
    %1128 = vmatpush1.msra.mxu0 0.0
    %1129 = vmatprep.subr.mxu0 0.0
    %1130 = vmatpush1.msra.mxu0 0.0
    %1131 = vmatprep.subr.mxu0 0.0
    %1132 = vmatpush1.msra.mxu0 0.0
    %1133 = vmatprep.mubr.f32.mxu0 0.0
    %1134 = vmatmul.mubr.f32.gmra.mrb[0].mxu0 %v1004
    %v1135 = vpop.f32.mrb[0].mxu0
    %v1136 = vadd.f32 0.0, %v1135
    %v1137 = vpop.f32.mrb[0].mxu0
    %v1138 = vadd.f32 0.0, %v1137
    %1139 = vdwg.mxu0
    %1140 = vmatprep.subr.mxu0 %v1008
    %1141 = vmatpush1.msra.mxu0 %v1007
    %1142 = vmatprep.subr.mxu0 %v1012
    %1143 = vmatpush1.msra.mxu0 %v1011
    %1144 = vmatprep.subr.mxu0 %v1016
    %1145 = vmatpush1.msra.mxu0 %v1015
    %1146 = vmatprep.subr.mxu0 %v1020
    %1147 = vmatpush1.msra.mxu0 %v1019
    %1148 = vmatprep.subr.mxu0 %v1024
    %1149 = vmatpush1.msra.mxu0 %v1023
    %1150 = vmatprep.subr.mxu0 %v1028
    %1151 = vmatpush1.msra.mxu0 %v1027
    %1152 = vmatprep.subr.mxu0 %v1032
    %1153 = vmatpush1.msra.mxu0 %v1031
    %1154 = vmatprep.subr.mxu0 %v1036
    %1155 = vmatpush1.msra.mxu0 %v1035
    %1156 = vmatprep.subr.mxu0 %v1040
    %1157 = vmatpush1.msra.mxu0 %v1039
    %1158 = vmatprep.subr.mxu0 %v1044
    %1159 = vmatpush1.msra.mxu0 %v1043
    %1160 = vmatprep.subr.mxu0 %v1048
    %1161 = vmatpush1.msra.mxu0 %v1047
    %1162 = vmatprep.subr.mxu0 %v1052
    %1163 = vmatpush1.msra.mxu0 %v1051
    %1164 = vmatprep.subr.mxu0 %v1056
    %1165 = vmatpush1.msra.mxu0 %v1055
    %1166 = vmatprep.subr.mxu0 %v1060
    %1167 = vmatpush1.msra.mxu0 %v1059
    %1168 = vmatprep.subr.mxu0 %v1064
    %1169 = vmatpush1.msra.mxu0 %v1063
    %1170 = vmatprep.subr.mxu0 %v1068
    %1171 = vmatpush1.msra.mxu0 %v1067
    %1172 = vmatprep.subr.mxu0 0.0
    %1173 = vmatpush1.msra.mxu0 0.0
    %1174 = vmatprep.subr.mxu0 0.0
    %1175 = vmatpush1.msra.mxu0 0.0
    %1176 = vmatprep.subr.mxu0 0.0
    %1177 = vmatpush1.msra.mxu0 0.0
    %1178 = vmatprep.subr.mxu0 0.0
    %1179 = vmatpush1.msra.mxu0 0.0
    %1180 = vmatprep.subr.mxu0 0.0
    %1181 = vmatpush1.msra.mxu0 0.0
    %1182 = vmatprep.subr.mxu0 0.0
    %1183 = vmatpush1.msra.mxu0 0.0
    %1184 = vmatprep.subr.mxu0 0.0
    %1185 = vmatpush1.msra.mxu0 0.0
    %1186 = vmatprep.subr.mxu0 0.0
    %1187 = vmatpush1.msra.mxu0 0.0
    %1188 = vmatprep.subr.mxu0 0.0
    %1189 = vmatpush1.msra.mxu0 0.0
    %1190 = vmatprep.subr.mxu0 0.0
    %1191 = vmatpush1.msra.mxu0 0.0
    %1192 = vmatprep.subr.mxu0 0.0
    %1193 = vmatpush1.msra.mxu0 0.0
    %1194 = vmatprep.subr.mxu0 0.0
    %1195 = vmatpush1.msra.mxu0 0.0
    %1196 = vmatprep.subr.mxu0 0.0
    %1197 = vmatpush1.msra.mxu0 0.0
    %1198 = vmatprep.subr.mxu0 0.0
    %1199 = vmatpush1.msra.mxu0 0.0
    %1200 = vmatprep.subr.mxu0 0.0
    %1201 = vmatpush1.msra.mxu0 0.0
    %1202 = vmatprep.subr.mxu0 0.0
    %1203 = vmatpush1.msra.mxu0 0.0
    %1204 = vmatprep.mubr.f32.mxu0 0.0
    %1205 = vmatmul.mubr.f32.gmra.mrb[0].mxu0 %v1004
    %v1206 = vpop.f32.mrb[0].mxu0
    %v1207 = vadd.f32 0.0, %v1206
    %v1208 = vpop.f32.mrb[0].mxu0
    %v1209 = vadd.f32 0.0, %v1208
    %1210 = vdwg.mxu0
    %v1211 = vadd.f32 %v1000, %v1136
    %v1212 = vadd.f32 %v1001, %v1138
    %v1213 = vadd.f32 %v1002, %v1207
    %v1214 = vadd.f32 %v1003, %v1209
    %v1215 = vmul.f32 %v1211, 0.5
    %v1216 = vtanh.pop %v1215
    %v1217 = vmul.f32 %v1216, 0.5
    %v1218 = vadd.f32 %v1217, 0.5
    %v1219 = vmul.f32 %v1212, 0.5
    %v1220 = vtanh.pop %v1219
    %v1221 = vmul.f32 %v1220, 0.5
    %v1222 = vadd.f32 %v1221, 0.5
    %v1223 = vtanh.pop %v1213
    %v1224 = vmul.f32 %v1214, 0.5
    %v1225 = vtanh.pop %v1224
    %v1226 = vmul.f32 %v1225, 0.5
    %v1227 = vadd.f32 %v1226, 0.5
    %v1228 = vld [vmem:[#allocation4] sm:$0xff]
    %v1229 = vmul.f32 %v1222, %v1228
    %v1230 = vmul.f32 %v1218, %v1223
    %v1231 = vadd.f32 %v1229, %v1230
    %v1232 = vtanh.pop %v1231
    %v1233 = vmul.f32 %v1227, %v1232
    %1234 = vst [vmem:[#allocation4] sm:$0xff] %v1231
    %1235 = vst [vmem:[#allocation3] sm:$0xff] %v1233
    %s1236 = scalar_lea.vmem [#allocation8], 32
    %1237 = vst [vmem:[%s1236] sm:$0xff] %v1233
    %s1238 = scalar_lea.vmem [#allocation5], 160
    %v1239 = vld [vmem:[%s1238] sm:$0xff]
    %v1240 = vld [vmem:[%s1238 + $0x8] sm:$0xff]
    %v1241 = vld [vmem:[%s1238 + $0x10] sm:$0xff]
    %v1242 = vld [vmem:[%s1238 + $0x18] sm:$0xff]
    %v1243 = vld [vmem:[#allocation3] sm:$0xff]
    %v1244 = vld [vmem:[#allocation2] sm:$0xff]
    %v1245 = vld [vmem:[#allocation2 + $0x8] sm:$0xff]
    %v1246 = vld [vmem:[#allocation2 + $0x10] sm:$0xff]
    %v1247 = vld [vmem:[#allocation2 + $0x18] sm:$0xff]
    %v1248 = vld [vmem:[#allocation2 + $0x20] sm:$0xff]
    %v1249 = vld [vmem:[#allocation2 + $0x28] sm:$0xff]
    %v1250 = vld [vmem:[#allocation2 + $0x30] sm:$0xff]
    %v1251 = vld [vmem:[#allocation2 + $0x38] sm:$0xff]
    %v1252 = vld [vmem:[#allocation2 + $0x40] sm:$0xff]
    %v1253 = vld [vmem:[#allocation2 + $0x48] sm:$0xff]
    %v1254 = vld [vmem:[#allocation2 + $0x50] sm:$0xff]
    %v1255 = vld [vmem:[#allocation2 + $0x58] sm:$0xff]
    %v1256 = vld [vmem:[#allocation2 + $0x60] sm:$0xff]
    %v1257 = vld [vmem:[#allocation2 + $0x68] sm:$0xff]
    %v1258 = vld [vmem:[#allocation2 + $0x70] sm:$0xff]
    %v1259 = vld [vmem:[#allocation2 + $0x78] sm:$0xff]
    %v1260 = vld [vmem:[#allocation2 + $0x80] sm:$0xff]
    %v1261 = vld [vmem:[#allocation2 + $0x88] sm:$0xff]
    %v1262 = vld [vmem:[#allocation2 + $0x90] sm:$0xff]
    %v1263 = vld [vmem:[#allocation2 + $0x98] sm:$0xff]
    %v1264 = vld [vmem:[#allocation2 + $0xa0] sm:$0xff]
    %v1265 = vld [vmem:[#allocation2 + $0xa8] sm:$0xff]
    %v1266 = vld [vmem:[#allocation2 + $0xb0] sm:$0xff]
    %v1267 = vld [vmem:[#allocation2 + $0xb8] sm:$0xff]
    %v1268 = vld [vmem:[#allocation2 + $0xc0] sm:$0xff]
    %v1269 = vld [vmem:[#allocation2 + $0xc8] sm:$0xff]
    %v1270 = vld [vmem:[#allocation2 + $0xd0] sm:$0xff]
    %v1271 = vld [vmem:[#allocation2 + $0xd8] sm:$0xff]
    %v1272 = vld [vmem:[#allocation2 + $0xe0] sm:$0xff]
    %v1273 = vld [vmem:[#allocation2 + $0xe8] sm:$0xff]
    %v1274 = vld [vmem:[#allocation2 + $0xf0] sm:$0xff]
    %v1275 = vld [vmem:[#allocation2 + $0xf8] sm:$0xff]
    %v1276 = vld [vmem:[#allocation2 + $0x100] sm:$0xff]
    %v1277 = vld [vmem:[#allocation2 + $0x108] sm:$0xff]
    %v1278 = vld [vmem:[#allocation2 + $0x110] sm:$0xff]
    %v1279 = vld [vmem:[#allocation2 + $0x118] sm:$0xff]
    %v1280 = vld [vmem:[#allocation2 + $0x120] sm:$0xff]
    %v1281 = vld [vmem:[#allocation2 + $0x128] sm:$0xff]
    %v1282 = vld [vmem:[#allocation2 + $0x130] sm:$0xff]
    %v1283 = vld [vmem:[#allocation2 + $0x138] sm:$0xff]
    %v1284 = vld [vmem:[#allocation2 + $0x140] sm:$0xff]
    %v1285 = vld [vmem:[#allocation2 + $0x148] sm:$0xff]
    %v1286 = vld [vmem:[#allocation2 + $0x150] sm:$0xff]
    %v1287 = vld [vmem:[#allocation2 + $0x158] sm:$0xff]
    %v1288 = vld [vmem:[#allocation2 + $0x160] sm:$0xff]
    %v1289 = vld [vmem:[#allocation2 + $0x168] sm:$0xff]
    %v1290 = vld [vmem:[#allocation2 + $0x170] sm:$0xff]
    %v1291 = vld [vmem:[#allocation2 + $0x178] sm:$0xff]
    %v1292 = vld [vmem:[#allocation2 + $0x180] sm:$0xff]
    %v1293 = vld [vmem:[#allocation2 + $0x188] sm:$0xff]
    %v1294 = vld [vmem:[#allocation2 + $0x190] sm:$0xff]
    %v1295 = vld [vmem:[#allocation2 + $0x198] sm:$0xff]
    %v1296 = vld [vmem:[#allocation2 + $0x1a0] sm:$0xff]
    %v1297 = vld [vmem:[#allocation2 + $0x1a8] sm:$0xff]
    %v1298 = vld [vmem:[#allocation2 + $0x1b0] sm:$0xff]
    %v1299 = vld [vmem:[#allocation2 + $0x1b8] sm:$0xff]
    %v1300 = vld [vmem:[#allocation2 + $0x1c0] sm:$0xff]
    %v1301 = vld [vmem:[#allocation2 + $0x1c8] sm:$0xff]
    %v1302 = vld [vmem:[#allocation2 + $0x1d0] sm:$0xff]
    %v1303 = vld [vmem:[#allocation2 + $0x1d8] sm:$0xff]
    %v1304 = vld [vmem:[#allocation2 + $0x1e0] sm:$0xff]
    %v1305 = vld [vmem:[#allocation2 + $0x1e8] sm:$0xff]
    %v1306 = vld [vmem:[#allocation2 + $0x1f0] sm:$0xff]
    %v1307 = vld [vmem:[#allocation2 + $0x1f8] sm:$0xff]
    %1308 = vmatprep.subr.mxu0 %v1245
    %1309 = vmatpush1.msra.mxu0 %v1244
    %1310 = vmatprep.subr.mxu0 %v1249
    %1311 = vmatpush1.msra.mxu0 %v1248
    %1312 = vmatprep.subr.mxu0 %v1253
    %1313 = vmatpush1.msra.mxu0 %v1252
    %1314 = vmatprep.subr.mxu0 %v1257
    %1315 = vmatpush1.msra.mxu0 %v1256
    %1316 = vmatprep.subr.mxu0 %v1261
    %1317 = vmatpush1.msra.mxu0 %v1260
    %1318 = vmatprep.subr.mxu0 %v1265
    %1319 = vmatpush1.msra.mxu0 %v1264
    %1320 = vmatprep.subr.mxu0 %v1269
    %1321 = vmatpush1.msra.mxu0 %v1268
    %1322 = vmatprep.subr.mxu0 %v1273
    %1323 = vmatpush1.msra.mxu0 %v1272
    %1324 = vmatprep.subr.mxu0 %v1277
    %1325 = vmatpush1.msra.mxu0 %v1276
    %1326 = vmatprep.subr.mxu0 %v1281
    %1327 = vmatpush1.msra.mxu0 %v1280
    %1328 = vmatprep.subr.mxu0 %v1285
    %1329 = vmatpush1.msra.mxu0 %v1284
    %1330 = vmatprep.subr.mxu0 %v1289
    %1331 = vmatpush1.msra.mxu0 %v1288
    %1332 = vmatprep.subr.mxu0 %v1293
    %1333 = vmatpush1.msra.mxu0 %v1292
    %1334 = vmatprep.subr.mxu0 %v1297
    %1335 = vmatpush1.msra.mxu0 %v1296
    %1336 = vmatprep.subr.mxu0 %v1301
    %1337 = vmatpush1.msra.mxu0 %v1300
    %1338 = vmatprep.subr.mxu0 %v1305
    %1339 = vmatpush1.msra.mxu0 %v1304
    %1340 = vmatprep.subr.mxu0 0.0
    %1341 = vmatpush1.msra.mxu0 0.0
    %1342 = vmatprep.subr.mxu0 0.0
    %1343 = vmatpush1.msra.mxu0 0.0
    %1344 = vmatprep.subr.mxu0 0.0
    %1345 = vmatpush1.msra.mxu0 0.0
    %1346 = vmatprep.subr.mxu0 0.0
    %1347 = vmatpush1.msra.mxu0 0.0
    %1348 = vmatprep.subr.mxu0 0.0
    %1349 = vmatpush1.msra.mxu0 0.0
    %1350 = vmatprep.subr.mxu0 0.0
    %1351 = vmatpush1.msra.mxu0 0.0
    %1352 = vmatprep.subr.mxu0 0.0
    %1353 = vmatpush1.msra.mxu0 0.0
    %1354 = vmatprep.subr.mxu0 0.0
    %1355 = vmatpush1.msra.mxu0 0.0
    %1356 = vmatprep.subr.mxu0 0.0
    %1357 = vmatpush1.msra.mxu0 0.0
    %1358 = vmatprep.subr.mxu0 0.0
    %1359 = vmatpush1.msra.mxu0 0.0
    %1360 = vmatprep.subr.mxu0 0.0
    %1361 = vmatpush1.msra.mxu0 0.0
    %1362 = vmatprep.subr.mxu0 0.0
    %1363 = vmatpush1.msra.mxu0 0.0
    %1364 = vmatprep.subr.mxu0 0.0
    %1365 = vmatpush1.msra.mxu0 0.0
    %1366 = vmatprep.subr.mxu0 0.0
    %1367 = vmatpush1.msra.mxu0 0.0
    %1368 = vmatprep.subr.mxu0 0.0
    %1369 = vmatpush1.msra.mxu0 0.0
    %1370 = vmatprep.subr.mxu0 0.0
    %1371 = vmatpush1.msra.mxu0 0.0
    %1372 = vmatprep.mubr.f32.mxu0 0.0
    %1373 = vmatmul.mubr.f32.gmra.mrb[0].mxu0 %v1243
    %v1374 = vpop.f32.mrb[0].mxu0
    %v1375 = vadd.f32 0.0, %v1374
    %v1376 = vpop.f32.mrb[0].mxu0
    %v1377 = vadd.f32 0.0, %v1376
    %1378 = vdwg.mxu0
    %1379 = vmatprep.subr.mxu0 %v1247
    %1380 = vmatpush1.msra.mxu0 %v1246
    %1381 = vmatprep.subr.mxu0 %v1251
    %1382 = vmatpush1.msra.mxu0 %v1250
    %1383 = vmatprep.subr.mxu0 %v1255
    %1384 = vmatpush1.msra.mxu0 %v1254
    %1385 = vmatprep.subr.mxu0 %v1259
    %1386 = vmatpush1.msra.mxu0 %v1258
    %1387 = vmatprep.subr.mxu0 %v1263
    %1388 = vmatpush1.msra.mxu0 %v1262
    %1389 = vmatprep.subr.mxu0 %v1267
    %1390 = vmatpush1.msra.mxu0 %v1266
    %1391 = vmatprep.subr.mxu0 %v1271
    %1392 = vmatpush1.msra.mxu0 %v1270
    %1393 = vmatprep.subr.mxu0 %v1275
    %1394 = vmatpush1.msra.mxu0 %v1274
    %1395 = vmatprep.subr.mxu0 %v1279
    %1396 = vmatpush1.msra.mxu0 %v1278
    %1397 = vmatprep.subr.mxu0 %v1283
    %1398 = vmatpush1.msra.mxu0 %v1282
    %1399 = vmatprep.subr.mxu0 %v1287
    %1400 = vmatpush1.msra.mxu0 %v1286
    %1401 = vmatprep.subr.mxu0 %v1291
    %1402 = vmatpush1.msra.mxu0 %v1290
    %1403 = vmatprep.subr.mxu0 %v1295
    %1404 = vmatpush1.msra.mxu0 %v1294
    %1405 = vmatprep.subr.mxu0 %v1299
    %1406 = vmatpush1.msra.mxu0 %v1298
    %1407 = vmatprep.subr.mxu0 %v1303
    %1408 = vmatpush1.msra.mxu0 %v1302
    %1409 = vmatprep.subr.mxu0 %v1307
    %1410 = vmatpush1.msra.mxu0 %v1306
    %1411 = vmatprep.subr.mxu0 0.0
    %1412 = vmatpush1.msra.mxu0 0.0
    %1413 = vmatprep.subr.mxu0 0.0
    %1414 = vmatpush1.msra.mxu0 0.0
    %1415 = vmatprep.subr.mxu0 0.0
    %1416 = vmatpush1.msra.mxu0 0.0
    %1417 = vmatprep.subr.mxu0 0.0
    %1418 = vmatpush1.msra.mxu0 0.0
    %1419 = vmatprep.subr.mxu0 0.0
    %1420 = vmatpush1.msra.mxu0 0.0
    %1421 = vmatprep.subr.mxu0 0.0
    %1422 = vmatpush1.msra.mxu0 0.0
    %1423 = vmatprep.subr.mxu0 0.0
    %1424 = vmatpush1.msra.mxu0 0.0
    %1425 = vmatprep.subr.mxu0 0.0
    %1426 = vmatpush1.msra.mxu0 0.0
    %1427 = vmatprep.subr.mxu0 0.0
    %1428 = vmatpush1.msra.mxu0 0.0
    %1429 = vmatprep.subr.mxu0 0.0
    %1430 = vmatpush1.msra.mxu0 0.0
    %1431 = vmatprep.subr.mxu0 0.0
    %1432 = vmatpush1.msra.mxu0 0.0
    %1433 = vmatprep.subr.mxu0 0.0
    %1434 = vmatpush1.msra.mxu0 0.0
    %1435 = vmatprep.subr.mxu0 0.0
    %1436 = vmatpush1.msra.mxu0 0.0
    %1437 = vmatprep.subr.mxu0 0.0
    %1438 = vmatpush1.msra.mxu0 0.0
    %1439 = vmatprep.subr.mxu0 0.0
    %1440 = vmatpush1.msra.mxu0 0.0
    %1441 = vmatprep.subr.mxu0 0.0
    %1442 = vmatpush1.msra.mxu0 0.0
    %1443 = vmatprep.mubr.f32.mxu0 0.0
    %1444 = vmatmul.mubr.f32.gmra.mrb[0].mxu0 %v1243
    %v1445 = vpop.f32.mrb[0].mxu0
    %v1446 = vadd.f32 0.0, %v1445
    %v1447 = vpop.f32.mrb[0].mxu0
    %v1448 = vadd.f32 0.0, %v1447
    %1449 = vdwg.mxu0
    %v1450 = vadd.f32 %v1239, %v1375
    %v1451 = vadd.f32 %v1240, %v1377
    %v1452 = vadd.f32 %v1241, %v1446
    %v1453 = vadd.f32 %v1242, %v1448
    %v1454 = vmul.f32 %v1450, 0.5
    %v1455 = vtanh.pop %v1454
    %v1456 = vmul.f32 %v1455, 0.5
    %v1457 = vadd.f32 %v1456, 0.5
    %v1458 = vmul.f32 %v1451, 0.5
    %v1459 = vtanh.pop %v1458
    %v1460 = vmul.f32 %v1459, 0.5
    %v1461 = vadd.f32 %v1460, 0.5
    %v1462 = vtanh.pop %v1452
    %v1463 = vmul.f32 %v1453, 0.5
    %v1464 = vtanh.pop %v1463
    %v1465 = vmul.f32 %v1464, 0.5
    %v1466 = vadd.f32 %v1465, 0.5
    %v1467 = vld [vmem:[#allocation4] sm:$0xff]
    %v1468 = vmul.f32 %v1461, %v1467
    %v1469 = vmul.f32 %v1457, %v1462
    %v1470 = vadd.f32 %v1468, %v1469
    %v1471 = vtanh.pop %v1470
    %v1472 = vmul.f32 %v1466, %v1471
    %1473 = vst [vmem:[#allocation4] sm:$0xff] %v1470
    %1474 = vst [vmem:[#allocation3] sm:$0xff] %v1472
    %s1475 = scalar_lea.vmem [#allocation8], 40
    %1476 = vst [vmem:[%s1475] sm:$0xff] %v1472
    %s1477 = scalar_lea.vmem [#allocation5], 192
    %v1478 = vld [vmem:[%s1477] sm:$0xff]
    %v1479 = vld [vmem:[%s1477 + $0x8] sm:$0xff]
    %v1480 = vld [vmem:[%s1477 + $0x10] sm:$0xff]
    %v1481 = vld [vmem:[%s1477 + $0x18] sm:$0xff]
    %v1482 = vld [vmem:[#allocation3] sm:$0xff]
    %v1483 = vld [vmem:[#allocation2] sm:$0xff]
    %v1484 = vld [vmem:[#allocation2 + $0x8] sm:$0xff]
    %v1485 = vld [vmem:[#allocation2 + $0x10] sm:$0xff]
    %v1486 = vld [vmem:[#allocation2 + $0x18] sm:$0xff]
    %v1487 = vld [vmem:[#allocation2 + $0x20] sm:$0xff]
    %v1488 = vld [vmem:[#allocation2 + $0x28] sm:$0xff]
    %v1489 = vld [vmem:[#allocation2 + $0x30] sm:$0xff]
    %v1490 = vld [vmem:[#allocation2 + $0x38] sm:$0xff]
    %v1491 = vld [vmem:[#allocation2 + $0x40] sm:$0xff]
    %v1492 = vld [vmem:[#allocation2 + $0x48] sm:$0xff]
    %v1493 = vld [vmem:[#allocation2 + $0x50] sm:$0xff]
    %v1494 = vld [vmem:[#allocation2 + $0x58] sm:$0xff]
    %v1495 = vld [vmem:[#allocation2 + $0x60] sm:$0xff]
    %v1496 = vld [vmem:[#allocation2 + $0x68] sm:$0xff]
    %v1497 = vld [vmem:[#allocation2 + $0x70] sm:$0xff]
    %v1498 = vld [vmem:[#allocation2 + $0x78] sm:$0xff]
    %v1499 = vld [vmem:[#allocation2 + $0x80] sm:$0xff]
    %v1500 = vld [vmem:[#allocation2 + $0x88] sm:$0xff]
    %v1501 = vld [vmem:[#allocation2 + $0x90] sm:$0xff]
    %v1502 = vld [vmem:[#allocation2 + $0x98] sm:$0xff]
    %v1503 = vld [vmem:[#allocation2 + $0xa0] sm:$0xff]
    %v1504 = vld [vmem:[#allocation2 + $0xa8] sm:$0xff]
    %v1505 = vld [vmem:[#allocation2 + $0xb0] sm:$0xff]
    %v1506 = vld [vmem:[#allocation2 + $0xb8] sm:$0xff]
    %v1507 = vld [vmem:[#allocation2 + $0xc0] sm:$0xff]
    %v1508 = vld [vmem:[#allocation2 + $0xc8] sm:$0xff]
    %v1509 = vld [vmem:[#allocation2 + $0xd0] sm:$0xff]
    %v1510 = vld [vmem:[#allocation2 + $0xd8] sm:$0xff]
    %v1511 = vld [vmem:[#allocation2 + $0xe0] sm:$0xff]
    %v1512 = vld [vmem:[#allocation2 + $0xe8] sm:$0xff]
    %v1513 = vld [vmem:[#allocation2 + $0xf0] sm:$0xff]
    %v1514 = vld [vmem:[#allocation2 + $0xf8] sm:$0xff]
    %v1515 = vld [vmem:[#allocation2 + $0x100] sm:$0xff]
    %v1516 = vld [vmem:[#allocation2 + $0x108] sm:$0xff]
    %v1517 = vld [vmem:[#allocation2 + $0x110] sm:$0xff]
    %v1518 = vld [vmem:[#allocation2 + $0x118] sm:$0xff]
    %v1519 = vld [vmem:[#allocation2 + $0x120] sm:$0xff]
    %v1520 = vld [vmem:[#allocation2 + $0x128] sm:$0xff]
    %v1521 = vld [vmem:[#allocation2 + $0x130] sm:$0xff]
    %v1522 = vld [vmem:[#allocation2 + $0x138] sm:$0xff]
    %v1523 = vld [vmem:[#allocation2 + $0x140] sm:$0xff]
    %v1524 = vld [vmem:[#allocation2 + $0x148] sm:$0xff]
    %v1525 = vld [vmem:[#allocation2 + $0x150] sm:$0xff]
    %v1526 = vld [vmem:[#allocation2 + $0x158] sm:$0xff]
    %v1527 = vld [vmem:[#allocation2 + $0x160] sm:$0xff]
    %v1528 = vld [vmem:[#allocation2 + $0x168] sm:$0xff]
    %v1529 = vld [vmem:[#allocation2 + $0x170] sm:$0xff]
    %v1530 = vld [vmem:[#allocation2 + $0x178] sm:$0xff]
    %v1531 = vld [vmem:[#allocation2 + $0x180] sm:$0xff]
    %v1532 = vld [vmem:[#allocation2 + $0x188] sm:$0xff]
    %v1533 = vld [vmem:[#allocation2 + $0x190] sm:$0xff]
    %v1534 = vld [vmem:[#allocation2 + $0x198] sm:$0xff]
    %v1535 = vld [vmem:[#allocation2 + $0x1a0] sm:$0xff]
    %v1536 = vld [vmem:[#allocation2 + $0x1a8] sm:$0xff]
    %v1537 = vld [vmem:[#allocation2 + $0x1b0] sm:$0xff]
    %v1538 = vld [vmem:[#allocation2 + $0x1b8] sm:$0xff]
    %v1539 = vld [vmem:[#allocation2 + $0x1c0] sm:$0xff]
    %v1540 = vld [vmem:[#allocation2 + $0x1c8] sm:$0xff]
    %v1541 = vld [vmem:[#allocation2 + $0x1d0] sm:$0xff]
    %v1542 = vld [vmem:[#allocation2 + $0x1d8] sm:$0xff]
    %v1543 = vld [vmem:[#allocation2 + $0x1e0] sm:$0xff]
    %v1544 = vld [vmem:[#allocation2 + $0x1e8] sm:$0xff]
    %v1545 = vld [vmem:[#allocation2 + $0x1f0] sm:$0xff]
    %v1546 = vld [vmem:[#allocation2 + $0x1f8] sm:$0xff]
    %1547 = vmatprep.subr.mxu0 %v1484
    %1548 = vmatpush1.msra.mxu0 %v1483
    %1549 = vmatprep.subr.mxu0 %v1488
    %1550 = vmatpush1.msra.mxu0 %v1487
    %1551 = vmatprep.subr.mxu0 %v1492
    %1552 = vmatpush1.msra.mxu0 %v1491
    %1553 = vmatprep.subr.mxu0 %v1496
    %1554 = vmatpush1.msra.mxu0 %v1495
    %1555 = vmatprep.subr.mxu0 %v1500
    %1556 = vmatpush1.msra.mxu0 %v1499
    %1557 = vmatprep.subr.mxu0 %v1504
    %1558 = vmatpush1.msra.mxu0 %v1503
    %1559 = vmatprep.subr.mxu0 %v1508
    %1560 = vmatpush1.msra.mxu0 %v1507
    %1561 = vmatprep.subr.mxu0 %v1512
    %1562 = vmatpush1.msra.mxu0 %v1511
    %1563 = vmatprep.subr.mxu0 %v1516
    %1564 = vmatpush1.msra.mxu0 %v1515
    %1565 = vmatprep.subr.mxu0 %v1520
    %1566 = vmatpush1.msra.mxu0 %v1519
    %1567 = vmatprep.subr.mxu0 %v1524
    %1568 = vmatpush1.msra.mxu0 %v1523
    %1569 = vmatprep.subr.mxu0 %v1528
    %1570 = vmatpush1.msra.mxu0 %v1527
    %1571 = vmatprep.subr.mxu0 %v1532
    %1572 = vmatpush1.msra.mxu0 %v1531
    %1573 = vmatprep.subr.mxu0 %v1536
    %1574 = vmatpush1.msra.mxu0 %v1535
    %1575 = vmatprep.subr.mxu0 %v1540
    %1576 = vmatpush1.msra.mxu0 %v1539
    %1577 = vmatprep.subr.mxu0 %v1544
    %1578 = vmatpush1.msra.mxu0 %v1543
    %1579 = vmatprep.subr.mxu0 0.0
    %1580 = vmatpush1.msra.mxu0 0.0
    %1581 = vmatprep.subr.mxu0 0.0
    %1582 = vmatpush1.msra.mxu0 0.0
    %1583 = vmatprep.subr.mxu0 0.0
    %1584 = vmatpush1.msra.mxu0 0.0
    %1585 = vmatprep.subr.mxu0 0.0
    %1586 = vmatpush1.msra.mxu0 0.0
    %1587 = vmatprep.subr.mxu0 0.0
    %1588 = vmatpush1.msra.mxu0 0.0
    %1589 = vmatprep.subr.mxu0 0.0
    %1590 = vmatpush1.msra.mxu0 0.0
    %1591 = vmatprep.subr.mxu0 0.0
    %1592 = vmatpush1.msra.mxu0 0.0
    %1593 = vmatprep.subr.mxu0 0.0
    %1594 = vmatpush1.msra.mxu0 0.0
    %1595 = vmatprep.subr.mxu0 0.0
    %1596 = vmatpush1.msra.mxu0 0.0
    %1597 = vmatprep.subr.mxu0 0.0
    %1598 = vmatpush1.msra.mxu0 0.0
    %1599 = vmatprep.subr.mxu0 0.0
    %1600 = vmatpush1.msra.mxu0 0.0
    %1601 = vmatprep.subr.mxu0 0.0
    %1602 = vmatpush1.msra.mxu0 0.0
    %1603 = vmatprep.subr.mxu0 0.0
    %1604 = vmatpush1.msra.mxu0 0.0
    %1605 = vmatprep.subr.mxu0 0.0
    %1606 = vmatpush1.msra.mxu0 0.0
    %1607 = vmatprep.subr.mxu0 0.0
    %1608 = vmatpush1.msra.mxu0 0.0
    %1609 = vmatprep.subr.mxu0 0.0
    %1610 = vmatpush1.msra.mxu0 0.0
    %1611 = vmatprep.mubr.f32.mxu0 0.0
    %1612 = vmatmul.mubr.f32.gmra.mrb[0].mxu0 %v1482
    %v1613 = vpop.f32.mrb[0].mxu0
    %v1614 = vadd.f32 0.0, %v1613
    %v1615 = vpop.f32.mrb[0].mxu0
    %v1616 = vadd.f32 0.0, %v1615
    %1617 = vdwg.mxu0
    %1618 = vmatprep.subr.mxu0 %v1486
    %1619 = vmatpush1.msra.mxu0 %v1485
    %1620 = vmatprep.subr.mxu0 %v1490
    %1621 = vmatpush1.msra.mxu0 %v1489
    %1622 = vmatprep.subr.mxu0 %v1494
    %1623 = vmatpush1.msra.mxu0 %v1493
    %1624 = vmatprep.subr.mxu0 %v1498
    %1625 = vmatpush1.msra.mxu0 %v1497
    %1626 = vmatprep.subr.mxu0 %v1502
    %1627 = vmatpush1.msra.mxu0 %v1501
    %1628 = vmatprep.subr.mxu0 %v1506
    %1629 = vmatpush1.msra.mxu0 %v1505
    %1630 = vmatprep.subr.mxu0 %v1510
    %1631 = vmatpush1.msra.mxu0 %v1509
    %1632 = vmatprep.subr.mxu0 %v1514
    %1633 = vmatpush1.msra.mxu0 %v1513
    %1634 = vmatprep.subr.mxu0 %v1518
    %1635 = vmatpush1.msra.mxu0 %v1517
    %1636 = vmatprep.subr.mxu0 %v1522
    %1637 = vmatpush1.msra.mxu0 %v1521
    %1638 = vmatprep.subr.mxu0 %v1526
    %1639 = vmatpush1.msra.mxu0 %v1525
    %1640 = vmatprep.subr.mxu0 %v1530
    %1641 = vmatpush1.msra.mxu0 %v1529
    %1642 = vmatprep.subr.mxu0 %v1534
    %1643 = vmatpush1.msra.mxu0 %v1533
    %1644 = vmatprep.subr.mxu0 %v1538
    %1645 = vmatpush1.msra.mxu0 %v1537
    %1646 = vmatprep.subr.mxu0 %v1542
    %1647 = vmatpush1.msra.mxu0 %v1541
    %1648 = vmatprep.subr.mxu0 %v1546
    %1649 = vmatpush1.msra.mxu0 %v1545
    %1650 = vmatprep.subr.mxu0 0.0
    %1651 = vmatpush1.msra.mxu0 0.0
    %1652 = vmatprep.subr.mxu0 0.0
    %1653 = vmatpush1.msra.mxu0 0.0
    %1654 = vmatprep.subr.mxu0 0.0
    %1655 = vmatpush1.msra.mxu0 0.0
    %1656 = vmatprep.subr.mxu0 0.0
    %1657 = vmatpush1.msra.mxu0 0.0
    %1658 = vmatprep.subr.mxu0 0.0
    %1659 = vmatpush1.msra.mxu0 0.0
    %1660 = vmatprep.subr.mxu0 0.0
    %1661 = vmatpush1.msra.mxu0 0.0
    %1662 = vmatprep.subr.mxu0 0.0
    %1663 = vmatpush1.msra.mxu0 0.0
    %1664 = vmatprep.subr.mxu0 0.0
    %1665 = vmatpush1.msra.mxu0 0.0
    %1666 = vmatprep.subr.mxu0 0.0
    %1667 = vmatpush1.msra.mxu0 0.0
    %1668 = vmatprep.subr.mxu0 0.0
    %1669 = vmatpush1.msra.mxu0 0.0
    %1670 = vmatprep.subr.mxu0 0.0
    %1671 = vmatpush1.msra.mxu0 0.0
    %1672 = vmatprep.subr.mxu0 0.0
    %1673 = vmatpush1.msra.mxu0 0.0
    %1674 = vmatprep.subr.mxu0 0.0
    %1675 = vmatpush1.msra.mxu0 0.0
    %1676 = vmatprep.subr.mxu0 0.0
    %1677 = vmatpush1.msra.mxu0 0.0
    %1678 = vmatprep.subr.mxu0 0.0
    %1679 = vmatpush1.msra.mxu0 0.0
    %1680 = vmatprep.subr.mxu0 0.0
    %1681 = vmatpush1.msra.mxu0 0.0
    %1682 = vmatprep.mubr.f32.mxu0 0.0
    %1683 = vmatmul.mubr.f32.gmra.mrb[0].mxu0 %v1482
    %v1684 = vpop.f32.mrb[0].mxu0
    %v1685 = vadd.f32 0.0, %v1684
    %v1686 = vpop.f32.mrb[0].mxu0
    %v1687 = vadd.f32 0.0, %v1686
    %1688 = vdwg.mxu0
    %v1689 = vadd.f32 %v1478, %v1614
    %v1690 = vadd.f32 %v1479, %v1616
    %v1691 = vadd.f32 %v1480, %v1685
    %v1692 = vadd.f32 %v1481, %v1687
    %v1693 = vmul.f32 %v1689, 0.5
    %v1694 = vtanh.pop %v1693
    %v1695 = vmul.f32 %v1694, 0.5
    %v1696 = vadd.f32 %v1695, 0.5
    %v1697 = vmul.f32 %v1690, 0.5
    %v1698 = vtanh.pop %v1697
    %v1699 = vmul.f32 %v1698, 0.5
    %v1700 = vadd.f32 %v1699, 0.5
    %v1701 = vtanh.pop %v1691
    %v1702 = vmul.f32 %v1692, 0.5
    %v1703 = vtanh.pop %v1702
    %v1704 = vmul.f32 %v1703, 0.5
    %v1705 = vadd.f32 %v1704, 0.5
    %v1706 = vld [vmem:[#allocation4] sm:$0xff]
    %v1707 = vmul.f32 %v1700, %v1706
    %v1708 = vmul.f32 %v1696, %v1701
    %v1709 = vadd.f32 %v1707, %v1708
    %v1710 = vtanh.pop %v1709
    %v1711 = vmul.f32 %v1705, %v1710
    %1712 = vst [vmem:[#allocation4] sm:$0xff] %v1709
    %1713 = vst [vmem:[#allocation3] sm:$0xff] %v1711
    %s1714 = scalar_lea.vmem [#allocation8], 48
    %1715 = vst [vmem:[%s1714] sm:$0xff] %v1711
    %s1716 = scalar_lea.vmem [#allocation5], 224
    %v1717 = vld [vmem:[%s1716] sm:$0xff]
    %v1718 = vld [vmem:[%s1716 + $0x8] sm:$0xff]
    %v1719 = vld [vmem:[%s1716 + $0x10] sm:$0xff]
    %v1720 = vld [vmem:[%s1716 + $0x18] sm:$0xff]
    %v1721 = vld [vmem:[#allocation3] sm:$0xff]
    %v1722 = vld [vmem:[#allocation2] sm:$0xff]
    %v1723 = vld [vmem:[#allocation2 + $0x8] sm:$0xff]
    %v1724 = vld [vmem:[#allocation2 + $0x10] sm:$0xff]
    %v1725 = vld [vmem:[#allocation2 + $0x18] sm:$0xff]
    %v1726 = vld [vmem:[#allocation2 + $0x20] sm:$0xff]
    %v1727 = vld [vmem:[#allocation2 + $0x28] sm:$0xff]
    %v1728 = vld [vmem:[#allocation2 + $0x30] sm:$0xff]
    %v1729 = vld [vmem:[#allocation2 + $0x38] sm:$0xff]
    %v1730 = vld [vmem:[#allocation2 + $0x40] sm:$0xff]
    %v1731 = vld [vmem:[#allocation2 + $0x48] sm:$0xff]
    %v1732 = vld [vmem:[#allocation2 + $0x50] sm:$0xff]
    %v1733 = vld [vmem:[#allocation2 + $0x58] sm:$0xff]
    %v1734 = vld [vmem:[#allocation2 + $0x60] sm:$0xff]
    %v1735 = vld [vmem:[#allocation2 + $0x68] sm:$0xff]
    %v1736 = vld [vmem:[#allocation2 + $0x70] sm:$0xff]
    %v1737 = vld [vmem:[#allocation2 + $0x78] sm:$0xff]
    %v1738 = vld [vmem:[#allocation2 + $0x80] sm:$0xff]
    %v1739 = vld [vmem:[#allocation2 + $0x88] sm:$0xff]
    %v1740 = vld [vmem:[#allocation2 + $0x90] sm:$0xff]
    %v1741 = vld [vmem:[#allocation2 + $0x98] sm:$0xff]
    %v1742 = vld [vmem:[#allocation2 + $0xa0] sm:$0xff]
    %v1743 = vld [vmem:[#allocation2 + $0xa8] sm:$0xff]
    %v1744 = vld [vmem:[#allocation2 + $0xb0] sm:$0xff]
    %v1745 = vld [vmem:[#allocation2 + $0xb8] sm:$0xff]
    %v1746 = vld [vmem:[#allocation2 + $0xc0] sm:$0xff]
    %v1747 = vld [vmem:[#allocation2 + $0xc8] sm:$0xff]
    %v1748 = vld [vmem:[#allocation2 + $0xd0] sm:$0xff]
    %v1749 = vld [vmem:[#allocation2 + $0xd8] sm:$0xff]
    %v1750 = vld [vmem:[#allocation2 + $0xe0] sm:$0xff]
    %v1751 = vld [vmem:[#allocation2 + $0xe8] sm:$0xff]
    %v1752 = vld [vmem:[#allocation2 + $0xf0] sm:$0xff]
    %v1753 = vld [vmem:[#allocation2 + $0xf8] sm:$0xff]
    %v1754 = vld [vmem:[#allocation2 + $0x100] sm:$0xff]
    %v1755 = vld [vmem:[#allocation2 + $0x108] sm:$0xff]
    %v1756 = vld [vmem:[#allocation2 + $0x110] sm:$0xff]
    %v1757 = vld [vmem:[#allocation2 + $0x118] sm:$0xff]
    %v1758 = vld [vmem:[#allocation2 + $0x120] sm:$0xff]
    %v1759 = vld [vmem:[#allocation2 + $0x128] sm:$0xff]
    %v1760 = vld [vmem:[#allocation2 + $0x130] sm:$0xff]
    %v1761 = vld [vmem:[#allocation2 + $0x138] sm:$0xff]
    %v1762 = vld [vmem:[#allocation2 + $0x140] sm:$0xff]
    %v1763 = vld [vmem:[#allocation2 + $0x148] sm:$0xff]
    %v1764 = vld [vmem:[#allocation2 + $0x150] sm:$0xff]
    %v1765 = vld [vmem:[#allocation2 + $0x158] sm:$0xff]
    %v1766 = vld [vmem:[#allocation2 + $0x160] sm:$0xff]
    %v1767 = vld [vmem:[#allocation2 + $0x168] sm:$0xff]
    %v1768 = vld [vmem:[#allocation2 + $0x170] sm:$0xff]
    %v1769 = vld [vmem:[#allocation2 + $0x178] sm:$0xff]
    %v1770 = vld [vmem:[#allocation2 + $0x180] sm:$0xff]
    %v1771 = vld [vmem:[#allocation2 + $0x188] sm:$0xff]
    %v1772 = vld [vmem:[#allocation2 + $0x190] sm:$0xff]
    %v1773 = vld [vmem:[#allocation2 + $0x198] sm:$0xff]
    %v1774 = vld [vmem:[#allocation2 + $0x1a0] sm:$0xff]
    %v1775 = vld [vmem:[#allocation2 + $0x1a8] sm:$0xff]
    %v1776 = vld [vmem:[#allocation2 + $0x1b0] sm:$0xff]
    %v1777 = vld [vmem:[#allocation2 + $0x1b8] sm:$0xff]
    %v1778 = vld [vmem:[#allocation2 + $0x1c0] sm:$0xff]
    %v1779 = vld [vmem:[#allocation2 + $0x1c8] sm:$0xff]
    %v1780 = vld [vmem:[#allocation2 + $0x1d0] sm:$0xff]
    %v1781 = vld [vmem:[#allocation2 + $0x1d8] sm:$0xff]
    %v1782 = vld [vmem:[#allocation2 + $0x1e0] sm:$0xff]
    %v1783 = vld [vmem:[#allocation2 + $0x1e8] sm:$0xff]
    %v1784 = vld [vmem:[#allocation2 + $0x1f0] sm:$0xff]
    %v1785 = vld [vmem:[#allocation2 + $0x1f8] sm:$0xff]
    %1786 = vmatprep.subr.mxu0 %v1723
    %1787 = vmatpush1.msra.mxu0 %v1722
    %1788 = vmatprep.subr.mxu0 %v1727
    %1789 = vmatpush1.msra.mxu0 %v1726
    %1790 = vmatprep.subr.mxu0 %v1731
    %1791 = vmatpush1.msra.mxu0 %v1730
    %1792 = vmatprep.subr.mxu0 %v1735
    %1793 = vmatpush1.msra.mxu0 %v1734
    %1794 = vmatprep.subr.mxu0 %v1739
    %1795 = vmatpush1.msra.mxu0 %v1738
    %1796 = vmatprep.subr.mxu0 %v1743
    %1797 = vmatpush1.msra.mxu0 %v1742
    %1798 = vmatprep.subr.mxu0 %v1747
    %1799 = vmatpush1.msra.mxu0 %v1746
    %1800 = vmatprep.subr.mxu0 %v1751
    %1801 = vmatpush1.msra.mxu0 %v1750
    %1802 = vmatprep.subr.mxu0 %v1755
    %1803 = vmatpush1.msra.mxu0 %v1754
    %1804 = vmatprep.subr.mxu0 %v1759
    %1805 = vmatpush1.msra.mxu0 %v1758
    %1806 = vmatprep.subr.mxu0 %v1763
    %1807 = vmatpush1.msra.mxu0 %v1762
    %1808 = vmatprep.subr.mxu0 %v1767
    %1809 = vmatpush1.msra.mxu0 %v1766
    %1810 = vmatprep.subr.mxu0 %v1771
    %1811 = vmatpush1.msra.mxu0 %v1770
    %1812 = vmatprep.subr.mxu0 %v1775
    %1813 = vmatpush1.msra.mxu0 %v1774
    %1814 = vmatprep.subr.mxu0 %v1779
    %1815 = vmatpush1.msra.mxu0 %v1778
    %1816 = vmatprep.subr.mxu0 %v1783
    %1817 = vmatpush1.msra.mxu0 %v1782
    %1818 = vmatprep.subr.mxu0 0.0
    %1819 = vmatpush1.msra.mxu0 0.0
    %1820 = vmatprep.subr.mxu0 0.0
    %1821 = vmatpush1.msra.mxu0 0.0
    %1822 = vmatprep.subr.mxu0 0.0
    %1823 = vmatpush1.msra.mxu0 0.0
    %1824 = vmatprep.subr.mxu0 0.0
    %1825 = vmatpush1.msra.mxu0 0.0
    %1826 = vmatprep.subr.mxu0 0.0
    %1827 = vmatpush1.msra.mxu0 0.0
    %1828 = vmatprep.subr.mxu0 0.0
    %1829 = vmatpush1.msra.mxu0 0.0
    %1830 = vmatprep.subr.mxu0 0.0
    %1831 = vmatpush1.msra.mxu0 0.0
    %1832 = vmatprep.subr.mxu0 0.0
    %1833 = vmatpush1.msra.mxu0 0.0
    %1834 = vmatprep.subr.mxu0 0.0
    %1835 = vmatpush1.msra.mxu0 0.0
    %1836 = vmatprep.subr.mxu0 0.0
    %1837 = vmatpush1.msra.mxu0 0.0
    %1838 = vmatprep.subr.mxu0 0.0
    %1839 = vmatpush1.msra.mxu0 0.0
    %1840 = vmatprep.subr.mxu0 0.0
    %1841 = vmatpush1.msra.mxu0 0.0
    %1842 = vmatprep.subr.mxu0 0.0
    %1843 = vmatpush1.msra.mxu0 0.0
    %1844 = vmatprep.subr.mxu0 0.0
    %1845 = vmatpush1.msra.mxu0 0.0
    %1846 = vmatprep.subr.mxu0 0.0
    %1847 = vmatpush1.msra.mxu0 0.0
    %1848 = vmatprep.subr.mxu0 0.0
    %1849 = vmatpush1.msra.mxu0 0.0
    %1850 = vmatprep.mubr.f32.mxu0 0.0
    %1851 = vmatmul.mubr.f32.gmra.mrb[0].mxu0 %v1721
    %v1852 = vpop.f32.mrb[0].mxu0
    %v1853 = vadd.f32 0.0, %v1852
    %v1854 = vpop.f32.mrb[0].mxu0
    %v1855 = vadd.f32 0.0, %v1854
    %1856 = vdwg.mxu0
    %1857 = vmatprep.subr.mxu0 %v1725
    %1858 = vmatpush1.msra.mxu0 %v1724
    %1859 = vmatprep.subr.mxu0 %v1729
    %1860 = vmatpush1.msra.mxu0 %v1728
    %1861 = vmatprep.subr.mxu0 %v1733
    %1862 = vmatpush1.msra.mxu0 %v1732
    %1863 = vmatprep.subr.mxu0 %v1737
    %1864 = vmatpush1.msra.mxu0 %v1736
    %1865 = vmatprep.subr.mxu0 %v1741
    %1866 = vmatpush1.msra.mxu0 %v1740
    %1867 = vmatprep.subr.mxu0 %v1745
    %1868 = vmatpush1.msra.mxu0 %v1744
    %1869 = vmatprep.subr.mxu0 %v1749
    %1870 = vmatpush1.msra.mxu0 %v1748
    %1871 = vmatprep.subr.mxu0 %v1753
    %1872 = vmatpush1.msra.mxu0 %v1752
    %1873 = vmatprep.subr.mxu0 %v1757
    %1874 = vmatpush1.msra.mxu0 %v1756
    %1875 = vmatprep.subr.mxu0 %v1761
    %1876 = vmatpush1.msra.mxu0 %v1760
    %1877 = vmatprep.subr.mxu0 %v1765
    %1878 = vmatpush1.msra.mxu0 %v1764
    %1879 = vmatprep.subr.mxu0 %v1769
    %1880 = vmatpush1.msra.mxu0 %v1768
    %1881 = vmatprep.subr.mxu0 %v1773
    %1882 = vmatpush1.msra.mxu0 %v1772
    %1883 = vmatprep.subr.mxu0 %v1777
    %1884 = vmatpush1.msra.mxu0 %v1776
    %1885 = vmatprep.subr.mxu0 %v1781
    %1886 = vmatpush1.msra.mxu0 %v1780
    %1887 = vmatprep.subr.mxu0 %v1785
    %1888 = vmatpush1.msra.mxu0 %v1784
    %1889 = vmatprep.subr.mxu0 0.0
    %1890 = vmatpush1.msra.mxu0 0.0
    %1891 = vmatprep.subr.mxu0 0.0
    %1892 = vmatpush1.msra.mxu0 0.0
    %1893 = vmatprep.subr.mxu0 0.0
    %1894 = vmatpush1.msra.mxu0 0.0
    %1895 = vmatprep.subr.mxu0 0.0
    %1896 = vmatpush1.msra.mxu0 0.0
    %1897 = vmatprep.subr.mxu0 0.0
    %1898 = vmatpush1.msra.mxu0 0.0
    %1899 = vmatprep.subr.mxu0 0.0
    %1900 = vmatpush1.msra.mxu0 0.0
    %1901 = vmatprep.subr.mxu0 0.0
    %1902 = vmatpush1.msra.mxu0 0.0
    %1903 = vmatprep.subr.mxu0 0.0
    %1904 = vmatpush1.msra.mxu0 0.0
    %1905 = vmatprep.subr.mxu0 0.0
    %1906 = vmatpush1.msra.mxu0 0.0
    %1907 = vmatprep.subr.mxu0 0.0
    %1908 = vmatpush1.msra.mxu0 0.0
    %1909 = vmatprep.subr.mxu0 0.0
    %1910 = vmatpush1.msra.mxu0 0.0
    %1911 = vmatprep.subr.mxu0 0.0
    %1912 = vmatpush1.msra.mxu0 0.0
    %1913 = vmatprep.subr.mxu0 0.0
    %1914 = vmatpush1.msra.mxu0 0.0
    %1915 = vmatprep.subr.mxu0 0.0
    %1916 = vmatpush1.msra.mxu0 0.0
    %1917 = vmatprep.subr.mxu0 0.0
    %1918 = vmatpush1.msra.mxu0 0.0
    %1919 = vmatprep.subr.mxu0 0.0
    %1920 = vmatpush1.msra.mxu0 0.0
    %1921 = vmatprep.mubr.f32.mxu0 0.0
    %1922 = vmatmul.mubr.f32.gmra.mrb[0].mxu0 %v1721
    %v1923 = vpop.f32.mrb[0].mxu0
    %v1924 = vadd.f32 0.0, %v1923
    %v1925 = vpop.f32.mrb[0].mxu0
    %v1926 = vadd.f32 0.0, %v1925
    %1927 = vdwg.mxu0
    %v1928 = vadd.f32 %v1717, %v1853
    %v1929 = vadd.f32 %v1718, %v1855
    %v1930 = vadd.f32 %v1719, %v1924
    %v1931 = vadd.f32 %v1720, %v1926
    %v1932 = vmul.f32 %v1928, 0.5
    %v1933 = vtanh.pop %v1932
    %v1934 = vmul.f32 %v1933, 0.5
    %v1935 = vadd.f32 %v1934, 0.5
    %v1936 = vmul.f32 %v1929, 0.5
    %v1937 = vtanh.pop %v1936
    %v1938 = vmul.f32 %v1937, 0.5
    %v1939 = vadd.f32 %v1938, 0.5
    %v1940 = vtanh.pop %v1930
    %v1941 = vmul.f32 %v1931, 0.5
    %v1942 = vtanh.pop %v1941
    %v1943 = vmul.f32 %v1942, 0.5
    %v1944 = vadd.f32 %v1943, 0.5
    %v1945 = vld [vmem:[#allocation4] sm:$0xff]
    %v1946 = vmul.f32 %v1939, %v1945
    %v1947 = vmul.f32 %v1935, %v1940
    %v1948 = vadd.f32 %v1946, %v1947
    %v1949 = vtanh.pop %v1948
    %v1950 = vmul.f32 %v1944, %v1949
    %1951 = vst [vmem:[#allocation4] sm:$0xff] %v1948
    %1952 = vst [vmem:[#allocation3] sm:$0xff] %v1950
    %s1953 = scalar_lea.vmem [#allocation8], 56
    %1954 = vst [vmem:[%s1953] sm:$0xff] %v1950
    // Predicated region
    $region19: #{tpu_custom_call.1} parent=1 // pred_check
      _
    $region20: #{tpu_custom_call.1} parent=1 // pred_check_branch
      %1956 = sbr.rel (0) target = $region22
    $region21: #{tpu_custom_call.1} parent=1 // pred_region
      %s1958 = ssub.s32 1024, 1024
      %1959 = vsyncadd [#allocation7], %s1958
      %s1960 = sshll.u32 [#allocation8], 4
      %s1961 = int_to_ptr.vmem [resolvable:$true] %s1960
      %1966 = dma.vmem_to_hbm [thread:$0]  %s1961, 1024, %s2, [#allocation7], 128, 128, 8
    $region22: #{tpu_custom_call.1} parent=1 // pred_fallthru
      _
    // Predicated region
    $region23: #{tpu_custom_call.1} parent=1 // pred_check
      _
    $region24: #{tpu_custom_call.1} parent=1 // pred_check_branch
      %1968 = sbr.rel (0) target = $region26
    $region25: #{tpu_custom_call.1} parent=1 // pred_region
      %1969 = dma.done [#allocation7], 1024
    $region26: #{tpu_custom_call.1} parent=1 // pred_fallthru
      _
    %1970 = vsyncpa [#allocation6], 1
    %1971 = vsyncpa [#allocation7], 1

</llo_original>
